<compile_context>
chip_gen: v6e
topology: v6e:2x2x1
jax: 0.10.0
libtpu: 0.0.40
codegen_flags: <defaults>
</compile_context>

<pallas_src>
import functools

import jax
import jax.numpy as jnp
from jax.experimental import pallas as pl
from jax.experimental.pallas import tpu as pltpu


# ---------------------------------------------------------------------------
# Kernels
# ---------------------------------------------------------------------------
def _hebing_fused_kernel(x_ref, sw_ref, st_ref, e_ref, o_ref, *, inv_hw):
    """Single-pass kernel.  Block = Bt batch elements, rows packed on sublanes.

    x_ref : (R, HWp)  R = Bt*Cp  (channels of Bt batch elements packed on sublanes)
    sw_ref: (Bt, R)   block-diagonal spatial-conv weights  Sw[b, b*Cp + c] = ws[c]
    st_ref: (Bt, R)   block-diagonal channel-fc weights    St[b, b*Cp + c] = wt[c]
    e_ref : (R, Bt)   0/1 membership matrix                 E[b*Cp + c, b] = 1
    """
    x = x_ref[...].astype(jnp.float32)                          # (R, HWp)

    # ---- kongjian (spatial gate): channel-weighted sum per (batch, position).
    # Cross-row mixing is done on the MXU so the packed-row layout stays dense.
    y = jnp.dot(sw_ref[...], x,
                precision=jax.lax.Precision.HIGHEST,
                preferred_element_type=jnp.float32)             # (Bt, HWp)
    g = jax.nn.sigmoid(y)
    g_rows = jnp.dot(e_ref[...], g,
                     precision=jax.lax.Precision.HIGHEST,
                     preferred_element_type=jnp.float32)        # (R, HWp)

    # ---- tongdao (channel gate): GAP over true HW, 1x1 fc, relu, scalar bcast.
    # Zero-padded lanes contribute 0 to the sum; divide by the true H*W.
    row_mean = jnp.sum(x, axis=1, keepdims=True) * inv_hw       # (R, 1)
    z = jnp.maximum(
        jnp.dot(st_ref[...], row_mean,
                precision=jax.lax.Precision.HIGHEST,
                preferred_element_type=jnp.float32), 0.0)       # (Bt, 1)
    z_rows = jnp.dot(e_ref[...], z,
                     precision=jax.lax.Precision.HIGHEST,
                     preferred_element_type=jnp.float32)        # (R, 1)

    o_ref[...] = jnp.maximum(x * z_rows, x * g_rows).astype(o_ref.dtype)


def _hebing_hw_tiled_kernel(x_ref, sw_ref, e_ref, z_ref, o_ref):
    """HW-tiled kernel: the channel gate z (only cross-HW dependency) is precomputed,
    so the body is purely local and HW can be tiled / sharded across TensorCores."""
    x = x_ref[...].astype(jnp.float32)                          # (R, HWt)
    y = jnp.dot(sw_ref[...], x,
                precision=jax.lax.Precision.HIGHEST,
                preferred_element_type=jnp.float32)             # (Bt, HWt)
    g_rows = jnp.dot(e_ref[...], jax.nn.sigmoid(y),
                     precision=jax.lax.Precision.HIGHEST,
                     preferred_element_type=jnp.float32)        # (R, HWt)
    z_rows = z_ref[...]                                         # (R, 1)
    o_ref[...] = jnp.maximum(x * z_rows, x * g_rows).astype(o_ref.dtype)


# ---------------------------------------------------------------------------
# Wrapper
# ---------------------------------------------------------------------------
def _round_up(v, m):
    return (v + m - 1) // m * m


def _pick_batch_tile(B, C, HWp, elem_bytes, budget_bytes):
    """Largest divisor Bt of B whose (Bt*C, HWp) block fits the budget and whose
    sublane extent Bt*C is 8-aligned (or the block spans the full row extent)."""
    for bt in range(B, 0, -1):
        if B % bt:
            continue
        if bt * C * HWp * elem_bytes > budget_bytes:
            continue
        if (bt * C) % 8 == 0 or bt == B:
            return bt
    return None


def hebing_forward(x, w_spatial, w_channel, *,
                   compute_io_dtype=None,
                   block_budget_bytes=2 * 1024 * 1024,
                   vmem_limit_bytes=32 * 1024 * 1024,
                   force_hw_tiled=False,
                   input_buffer_count=None):
    """hebing forward.  x: (B, C, H, W); w_spatial, w_channel: (C,) 1x1-conv weights.

    compute_io_dtype: optional (e.g. jnp.bfloat16) for the HBM-bound data path;
                      all reductions / gates stay f32 inside the kernel.
    force_hw_tiled:   use the decoupled-z, HW-tiled kernel (recommended on v7x when
                      a per-batch slab is too large, or when B is too small to feed
                      both TensorCores).
    input_buffer_count: optional pl.Buffered(n) depth for the x input (v5e tuning).
    """
    B, C, H, W = x.shape
    HW = H * W
    HWp = _round_up(HW, 128)              # lane-dense blocks (multiple of 128)
    io_dtype = jnp.dtype(compute_io_dtype) if compute_io_dtype is not None else x.dtype
    elem = jnp.dtype(io_dtype).itemsize

    ws = jnp.asarray(w_spatial, jnp.float32).reshape(C)
    wt = jnp.asarray(w_channel, jnp.float32).reshape(C)

    # ---- choose batch tile (Bt) and channel padding (Cp) ---------------------
    cp = C
    bt = None
    if not force_hw_tiled:
        bt = _pick_batch_tile(B, C, HWp, elem, block_budget_bytes)
        if bt is None and C % 8 != 0:
            cp = _round_up(C, 8)
            bt = _pick_batch_tile(B, cp, HWp, elem, block_budget_bytes)
    use_hw_tiled = bt is None
    if use_hw_tiled:
        # Per-batch slab too large for one block (or forced): decouple z, tile HW.
        bt = 1
        cp = _round_up(C, 8)
    R = bt * cp

    # ---- packed-row input (zero padding so it cannot bias any reduction) -----
    x3 = x.reshape(B, C, HW).astype(io_dtype)
    if cp != C:
        x3 = jnp.pad(x3, ((0, 0), (0, cp - C), (0, 0)))
    if HWp != HW:
        x3 = jnp.pad(x3, ((0, 0), (0, 0), (0, HWp - HW)))
    x2 = x3.reshape(B * cp, HWp)

    ws_p = jnp.pad(ws, (0, cp - C)) if cp != C else ws
    wt_p = jnp.pad(wt, (0, cp - C)) if cp != C else wt
    eye = jnp.eye(bt, dtype=jnp.float32)
    sw = jnp.kron(eye, ws_p.reshape(1, cp))                   # (bt, R)
    st = jnp.kron(eye, wt_p.reshape(1, cp))                   # (bt, R)
    emb = jnp.kron(eye, jnp.ones((cp, 1), jnp.float32))       # (R, bt)

    if not use_hw_tiled:
        x_spec_kwargs = {}
        if input_buffer_count is not None:   # e.g. 3 on v5e if the DMA is still exposed
            x_spec_kwargs["pipeline_mode"] = pl.Buffered(input_buffer_count)
        x_spec = pl.BlockSpec((R, HWp), lambda b: (b, 0), **x_spec_kwargs)

        out2 = pl.pallas_call(
            functools.partial(_hebing_fused_kernel, inv_hw=1.0 / float(HW)),
            out_shape=jax.ShapeDtypeStruct((B * cp, HWp), io_dtype),
            grid_spec=pltpu.PrefetchScalarGridSpec(
                num_scalar_prefetch=0,
                grid=(B // bt,),
                in_specs=[x_spec,
                          pl.BlockSpec((bt, R), lambda b: (0, 0)),
                          pl.BlockSpec((bt, R), lambda b: (0, 0)),
                          pl.BlockSpec((R, bt), lambda b: (0, 0))],
                out_specs=pl.BlockSpec((R, HWp), lambda b: (b, 0)),
            ),
            compiler_params=pltpu.CompilerParams(
                dimension_semantics=("parallel",),
                vmem_limit_bytes=vmem_limit_bytes),
        )(x2, sw, st, emb)
    else:
        # Channel gate z per batch element: cheap wrapper GAP + dot + relu (f32, true HW).
        m = jnp.mean(x.reshape(B, C, HW).astype(jnp.float32), axis=-1)        # (B, C)
        z = jnp.maximum(jnp.sum(m * wt[None, :], axis=-1), 0.0)               # (B,)
        z_rows = jnp.repeat(z, cp).reshape(B * cp, 1).astype(jnp.float32)     # (B*cp, 1)

        # HW tile: largest 128-multiple divisor of HWp that fits the block budget.
        n128 = HWp // 128
        d = 1
        for cand in range(n128, 0, -1):
            if n128 % cand == 0 and R * cand * 128 * elem <= block_budget_bytes:
                d = cand
                break
        HWt = d * 128

        out2 = pl.pallas_call(
            _hebing_hw_tiled_kernel,
            out_shape=jax.ShapeDtypeStruct((B * cp, HWp), io_dtype),
            grid_spec=pltpu.PrefetchScalarGridSpec(
                num_scalar_prefetch=0,
                grid=(B // bt, HWp // HWt),
                in_specs=[pl.BlockSpec((R, HWt), lambda b, t: (b, t)),
                          pl.BlockSpec((bt, R), lambda b, t: (0, 0)),
                          pl.BlockSpec((R, bt), lambda b, t: (0, 0)),
                          pl.BlockSpec((R, 1), lambda b, t: (b, 0))],
                out_specs=pl.BlockSpec((R, HWt), lambda b, t: (b, t)),
            ),
            compiler_params=pltpu.CompilerParams(
                dimension_semantics=("parallel", "parallel"),
                vmem_limit_bytes=vmem_limit_bytes),
        )(x2, sw, emb, z_rows)

    return out2.reshape(B, cp, HWp)[:, :C, :HW].reshape(B, C, H, W)


# ---------------------------------------------------------------------------
# Pure-JAX reference (matmul-free so it is exact f32)
# ---------------------------------------------------------------------------
def hebing_reference(x, w_spatial, w_channel):
    ws = w_spatial.reshape(-1)
    wt = w_channel.reshape(-1)
    y_s = jnp.sum(x * ws[None, :, None, None], axis=1, keepdims=True)   # (B,1,H,W)
    u_k = x * jax.nn.sigmoid(y_s)
    m = jnp.mean(x, axis=(2, 3))                                        # (B,C)
    z = jnp.maximum(jnp.sum(m * wt[None, :], axis=1), 0.0)              # (B,)
    u_t = x * z[:, None, None, None]
    return jnp.maximum(u_t, u_k)


if __name__ == "__main__":
    key = jax.random.PRNGKey(0)
    k_x, k_ws, k_wt = jax.random.split(key, 3)

    B, C, H, W = 2, 4, 16, 16
    x = jax.random.normal(k_x, (B, C, H, W), dtype=jnp.float32)
    bound = 1.0 / (C ** 0.5)
    w_spatial = jax.random.uniform(k_ws, (C,), minval=-bound, maxval=bound, dtype=jnp.float32)
    w_channel = jax.random.uniform(k_wt, (C,), minval=-bound, maxval=bound, dtype=jnp.float32)

    ref = hebing_reference(x, w_spatial, w_channel)

    # 1) default fused path (batch-packed rows, full HW per block)
    out = jax.block_until_ready(hebing_forward(x, w_spatial, w_channel))
    assert out.shape == (B, C, H, W)
    assert jnp.allclose(out, ref, atol=1e-4, rtol=1e-4), "fused path mismatch vs reference"

    # 2) HW-tiled path (decoupled channel gate), forced with a tiny block budget
    out_t = jax.block_until_ready(
        hebing_forward(x, w_spatial, w_channel,
                       force_hw_tiled=True, block_budget_bytes=8 * 128 * 4))
    assert jnp.allclose(out_t, ref, atol=1e-4, rtol=1e-4), "hw-tiled path mismatch vs reference"

    # 3) bf16 I/O variant (bandwidth saving; compute stays f32 in-kernel)
    out_bf = jax.block_until_ready(
        hebing_forward(x, w_spatial, w_channel, compute_io_dtype=jnp.bfloat16))
    ref_bf = hebing_reference(x.astype(jnp.bfloat16).astype(jnp.float32), w_spatial, w_channel)
    assert jnp.allclose(out_bf.astype(jnp.float32), ref_bf, atol=3e-2, rtol=3e-2), \
        "bf16 path mismatch vs bf16-rounded reference"

    print("KERNEL_OK")
</pallas_src>

<mosaic_0001>
module attributes {stable_mosaic.version = 11 : i64} {
  func.func @_hebing_fused_kernel(%arg0: i32, %arg1: memref<8x256xf32, #tpu.memory_space<vmem>>, %arg2: memref<2x8xf32, #tpu.memory_space<vmem>>, %arg3: memref<2x8xf32, #tpu.memory_space<vmem>>, %arg4: memref<8x2xf32, #tpu.memory_space<vmem>>, %arg5: memref<8x256xf32, #tpu.memory_space<vmem>>) attributes {dimension_semantics = [#tpu.dimension_semantics<parallel>], iteration_bounds = array<i64: 1>, scalar_prefetch = 0 : i64, scratch_operands = 0 : i64, tpu.core_type = #tpu.core_type<tc>, window_params = [{transform_indices = @transform_0, window_bounds = array<i64: 8, 256>}, {pipeline_mode = #tpu.pipeline_mode<synchronous>, transform_indices = @transform_1, window_bounds = array<i64: 2, 8>}, {pipeline_mode = #tpu.pipeline_mode<synchronous>, transform_indices = @transform_2, window_bounds = array<i64: 2, 8>}, {pipeline_mode = #tpu.pipeline_mode<synchronous>, transform_indices = @transform_3, window_bounds = array<i64: 8, 2>}, {transform_indices = @transform_4, window_bounds = array<i64: 8, 256>}]} {
    %c0 = arith.constant 0 : index
    %c0_0 = arith.constant 0 : index
    %0 = vector.load %arg1[%c0, %c0_0] : memref<8x256xf32, #tpu.memory_space<vmem>>, vector<8x256xf32>
    %c0_1 = arith.constant 0 : index
    %c0_2 = arith.constant 0 : index
    %1 = vector.load %arg2[%c0_1, %c0_2] : memref<2x8xf32, #tpu.memory_space<vmem>>, vector<2x8xf32>
    %cst = arith.constant dense<0.000000e+00> : vector<2x256xf32>
    %2 = tpu.matmul %1, %0, %cst {dimension_numbers = #tpu.dot_dimension_numbers<[1], [0], [0], [1], [0, 0, 1, 1], [], []>, precision = #tpu.contract_precision<fp32>} : vector<2x8xf32>, vector<8x256xf32>, vector<2x256xf32> -> vector<2x256xf32>
    %3 = arith.negf %2 : vector<2x256xf32>
    %4 = math.exp %3 : vector<2x256xf32>
    %cst_3 = arith.constant 1.000000e+00 : f32
    %5 = vector.broadcast %cst_3 : f32 to vector<2x256xf32>
    %6 = arith.addf %5, %4 : vector<2x256xf32>
    %7 = arith.divf %5, %6 : vector<2x256xf32>
    %c0_4 = arith.constant 0 : index
    %c0_5 = arith.constant 0 : index
    %8 = vector.load %arg4[%c0_4, %c0_5] : memref<8x2xf32, #tpu.memory_space<vmem>>, vector<8x2xf32>
    %cst_6 = arith.constant dense<0.000000e+00> : vector<8x256xf32>
    %9 = tpu.matmul %8, %7, %cst_6 {dimension_numbers = #tpu.dot_dimension_numbers<[1], [0], [0], [1], [0, 0, 1, 1], [], []>, precision = #tpu.contract_precision<fp32>} : vector<8x2xf32>, vector<2x256xf32>, vector<8x256xf32> -> vector<8x256xf32>
    %cst_7 = arith.constant dense<0.000000e+00> : vector<8xf32>
    %10 = vector.multi_reduction <add>, %0, %cst_7 [1] : vector<8x256xf32> to vector<8xf32>
    %11 = vector.shape_cast %10 : vector<8xf32> to vector<8x1xf32>
    %cst_8 = arith.constant 3.906250e-03 : f32
    %12 = vector.broadcast %cst_8 : f32 to vector<8x1xf32>
    %13 = arith.mulf %11, %12 : vector<8x1xf32>
    %c0_9 = arith.constant 0 : index
    %c0_10 = arith.constant 0 : index
    %14 = vector.load %arg3[%c0_9, %c0_10] : memref<2x8xf32, #tpu.memory_space<vmem>>, vector<2x8xf32>
    %cst_11 = arith.constant dense<0.000000e+00> : vector<2x1xf32>
    %15 = tpu.matmul %14, %13, %cst_11 {dimension_numbers = #tpu.dot_dimension_numbers<[1], [0], [0], [1], [0, 0, 1, 1], [], []>, precision = #tpu.contract_precision<fp32>} : vector<2x8xf32>, vector<8x1xf32>, vector<2x1xf32> -> vector<2x1xf32>
    %cst_12 = arith.constant 0.000000e+00 : f32
    %16 = vector.broadcast %cst_12 : f32 to vector<2x1xf32>
    %17 = arith.maximumf %15, %16 : vector<2x1xf32>
    %c0_13 = arith.constant 0 : index
    %c0_14 = arith.constant 0 : index
    %18 = vector.load %arg4[%c0_13, %c0_14] : memref<8x2xf32, #tpu.memory_space<vmem>>, vector<8x2xf32>
    %cst_15 = arith.constant dense<0.000000e+00> : vector<8x1xf32>
    %19 = tpu.matmul %18, %17, %cst_15 {dimension_numbers = #tpu.dot_dimension_numbers<[1], [0], [0], [1], [0, 0, 1, 1], [], []>, precision = #tpu.contract_precision<fp32>} : vector<8x2xf32>, vector<2x1xf32>, vector<8x1xf32> -> vector<8x1xf32>
    %20 = vector.broadcast %19 : vector<8x1xf32> to vector<8x256xf32>
    %21 = arith.mulf %0, %20 : vector<8x256xf32>
    %22 = arith.mulf %0, %9 : vector<8x256xf32>
    %23 = arith.maximumf %21, %22 : vector<8x256xf32>
    %c0_16 = arith.constant 0 : index
    %c0_17 = arith.constant 0 : index
    %24 = vector.load %arg5[%c0_16, %c0_17] : memref<8x256xf32, #tpu.memory_space<vmem>>, vector<8x256xf32>
    tpu.vector_store %arg5[%c0_16, %c0_17], %23 {strides = array<i32>} : memref<8x256xf32, #tpu.memory_space<vmem>>, vector<8x256xf32>,
    return
  }
  func.func @transform_0(%arg0: i32) -> (i32, i32) {
    %c0_i32 = arith.constant 0 : i32
    %c0_i32_0 = arith.constant 0 : i32
    return %arg0, %c0_i32 : i32, i32
  }
  func.func @transform_1(%arg0: i32) -> (i32, i32) {
    %c0_i32 = arith.constant 0 : i32
    %c0_i32_0 = arith.constant 0 : i32
    %c0_i32_1 = arith.constant 0 : i32
    return %c0_i32, %c0_i32_0 : i32, i32
  }
  func.func @transform_2(%arg0: i32) -> (i32, i32) {
    %c0_i32 = arith.constant 0 : i32
    %c0_i32_0 = arith.constant 0 : i32
    %c0_i32_1 = arith.constant 0 : i32
    return %c0_i32, %c0_i32_0 : i32, i32
  }
  func.func @transform_3(%arg0: i32) -> (i32, i32) {
    %c0_i32 = arith.constant 0 : i32
    %c0_i32_0 = arith.constant 0 : i32
    %c0_i32_1 = arith.constant 0 : i32
    return %c0_i32, %c0_i32_0 : i32, i32
  }
  func.func @transform_4(%arg0: i32) -> (i32, i32) {
    %c0_i32 = arith.constant 0 : i32
    %c0_i32_0 = arith.constant 0 : i32
    return %arg0, %c0_i32 : i32, i32
  }
}

</mosaic_0001>

<llo_original>
// kernel: tpu_custom_call.1
$region0: #{tpu_custom_call.1}
  #allocation0 [shape = 'u32[]', space=smem, size = 0x4, offset = 0x4, fixed_abs, tag = 'smem constant byte address 0x4 - core index']
  #allocation1 [shape = 'u32[144,128]{1,0:T(1,128)}', space=vmem, size = 0x12000, scoped, tag = 'internal scratch']
  %s0 = inlined_call_operand.hbm [shape: f32[8,256], index: 0, kind: input, shape index: {}]
  %s1 = inlined_call_operand.vmem [shape: f32[2,8], index: 1, kind: input, shape index: {}]
  %s2 = inlined_call_operand.vmem [shape: f32[2,8], index: 2, kind: input, shape index: {}]
  %s3 = inlined_call_operand.vmem [shape: f32[8,2], index: 3, kind: input, shape index: {}]
  %s4 = inlined_call_operand.hbm [shape: f32[8,256], index: 4, kind: output, shape index: {}]
  %s5 = sld [smem:[#allocation0]]
  $region30: #{tpu_custom_call.1} parent=0
    _
  %s7 = ssub.s32 1, %s5
  %s8 = scalar_select 0, %s7, %s5
  $region1: #{tpu_custom_call.1} parent=0
    #allocation2 [shape = 'u8[8192]{0}', space=vmem, size = 0x2000, scoped, tag = 'input window, operand 0, single buffered']
    #allocation3 [shape = 's32[1]{0}', space=sflag, size = 0x4, scoped, tag = 'scoped memory for tpu_custom_call.1']
    #allocation4 [shape = 's32[1]{0}', space=sflag, size = 0x4, scoped, tag = 'scoped memory for tpu_custom_call.1']
    #allocation5 [shape = 'u8[8192]{0}', space=vmem, size = 0x2000, scoped, tag = 'output window, operand 0, single buffered']
    %9 = vsyncpa [#allocation3], 0
    %10 = vsyncpa [#allocation4], 0
    // Predicated region
    $region2: #{tpu_custom_call.1} parent=1 // pred_check
      _
    $region3: #{tpu_custom_call.1} parent=1 // pred_check_branch
      %12 = sbr.rel (0) target = $region5
    $region4: #{tpu_custom_call.1} parent=1 // pred_region
      %s14 = ssub.s32 256, 256
      %15 = vsyncadd [#allocation3], %s14
      %s17 = sshll.u32 [#allocation2], 4
      %s18 = int_to_ptr.vmem [resolvable:$true] %s17
      %20 = dma.hbm_to_vmem [thread:$0]  %s0, 256, %s18, [#allocation3]
    $region5: #{tpu_custom_call.1} parent=1 // pred_fallthru
      _
    // Predicated region
    $region6: #{tpu_custom_call.1} parent=1 // pred_check
      _
    $region7: #{tpu_custom_call.1} parent=1 // pred_check_branch
      %22 = sbr.rel (0) target = $region9
    $region8: #{tpu_custom_call.1} parent=1 // pred_region
      _
    $region9: #{tpu_custom_call.1} parent=1 // pred_fallthru
      _
    // Predicated region
    $region10: #{tpu_custom_call.1} parent=1 // pred_check
      _
    $region11: #{tpu_custom_call.1} parent=1 // pred_check_branch
      %24 = sbr.rel (0) target = $region13
    $region12: #{tpu_custom_call.1} parent=1 // pred_region
      _
    $region13: #{tpu_custom_call.1} parent=1 // pred_fallthru
      _
    // Predicated region
    $region14: #{tpu_custom_call.1} parent=1 // pred_check
      _
    $region15: #{tpu_custom_call.1} parent=1 // pred_check_branch
      %26 = sbr.rel (0) target = $region17
    $region16: #{tpu_custom_call.1} parent=1 // pred_region
      _
    $region17: #{tpu_custom_call.1} parent=1 // pred_fallthru
      _
    // Predicated region
    $region18: #{tpu_custom_call.1} parent=1 // pred_check
      _
    $region19: #{tpu_custom_call.1} parent=1 // pred_check_branch
      %28 = sbr.rel (0) target = $region21
    $region20: #{tpu_custom_call.1} parent=1 // pred_region
      %29 = dma.done [#allocation3], 256
    $region21: #{tpu_custom_call.1} parent=1 // pred_fallthru
      _
    %v30 = vld [vmem:[#allocation2] sm:$0xff]
    %v31 = vld [vmem:[#allocation2 + $0x8] sm:$0xff]
    %v32 = vld [vmem:[%s1] sm:$0x3]
    %vm33 = vcmask 64512
    %v35 = vsel %vm33, %v32, 0
    %37 = vmatprep.subr.mxu0 0.0
    %38 = vmatpush1.msra.mxu0 0.0
    %39 = vmatprep.subr.mxu0 0.0
    %40 = vmatpush1.msra.mxu0 0.0
    %41 = vmatprep.subr.mxu0 0.0
    %42 = vmatpush1.msra.mxu0 0.0
    %43 = vmatprep.subr.mxu0 0.0
    %44 = vmatpush1.msra.mxu0 0.0
    %45 = vmatprep.subr.mxu0 0.0
    %46 = vmatpush1.msra.mxu0 0.0
    %47 = vmatprep.subr.mxu0 0.0
    %48 = vmatpush1.msra.mxu0 0.0
    %49 = vmatprep.subr.mxu0 0.0
    %50 = vmatpush1.msra.mxu0 0.0
    %51 = vmatprep.subr.mxu0 0.0
    %52 = vmatpush1.msra.mxu0 0.0
    %53 = vmatprep.subr.mxu0 0.0
    %54 = vmatpush1.msra.mxu0 0.0
    %55 = vmatprep.subr.mxu0 0.0
    %56 = vmatpush1.msra.mxu0 0.0
    %57 = vmatprep.subr.mxu0 0.0
    %58 = vmatpush1.msra.mxu0 0.0
    %59 = vmatprep.subr.mxu0 0.0
    %60 = vmatpush1.msra.mxu0 0.0
    %61 = vmatprep.subr.mxu0 0.0
    %62 = vmatpush1.msra.mxu0 0.0
    %63 = vmatprep.subr.mxu0 0.0
    %64 = vmatpush1.msra.mxu0 0.0
    %65 = vmatprep.subr.mxu0 0.0
    %66 = vmatpush1.msra.mxu0 0.0
    %v67 = vand.u32 %v31, 4294901760
    %68 = vmatprep.subr.mxu0 %v67
    %v69 = vand.u32 %v30, 4294901760
    %70 = vmatpush1.msra.mxu0 %v69
    %71 = vmatprep.subr.mxu0 0.0
    %72 = vmatpush2.msra.mxu0 0.0
    %73 = vmatprep.subr.mxu0 0.0
    %74 = vmatpush2.msra.mxu0 0.0
    %75 = vmatprep.subr.mxu0 0.0
    %76 = vmatpush2.msra.mxu0 0.0
    %77 = vmatprep.subr.mxu0 0.0
    %78 = vmatpush2.msra.mxu0 0.0
    %79 = vmatprep.subr.mxu0 0.0
    %80 = vmatpush2.msra.mxu0 0.0
    %81 = vmatprep.subr.mxu0 0.0
    %82 = vmatpush2.msra.mxu0 0.0
    %83 = vmatprep.subr.mxu0 0.0
    %84 = vmatpush2.msra.mxu0 0.0
    %85 = vmatprep.subr.mxu0 0.0
    %86 = vmatpush2.msra.mxu0 0.0
    %87 = vmatprep.subr.mxu0 0.0
    %88 = vmatpush2.msra.mxu0 0.0
    %89 = vmatprep.subr.mxu0 0.0
    %90 = vmatpush2.msra.mxu0 0.0
    %91 = vmatprep.subr.mxu0 0.0
    %92 = vmatpush2.msra.mxu0 0.0
    %93 = vmatprep.subr.mxu0 0.0
    %94 = vmatpush2.msra.mxu0 0.0
    %95 = vmatprep.subr.mxu0 0.0
    %96 = vmatpush2.msra.mxu0 0.0
    %97 = vmatprep.subr.mxu0 0.0
    %98 = vmatpush2.msra.mxu0 0.0
    %99 = vmatprep.subr.mxu0 0.0
    %100 = vmatpush2.msra.mxu0 0.0
    %101 = vmatprep.subr.mxu0 0.0
    %102 = vmatpush2.msra.mxu0 0.0
    %103 = vmatprep.mubr.f32.mxu0 0.0
    %v104 = vand.u32 %v35, 4294901760
    %v105 = vsub.f32 %v35, %v104
    %v106 = vand.u32 %v105, 4294901760
    %v107 = vsub.f32 %v105, %v106
    %v108 = vand.u32 %v107, 4294901760
    %109 = vmatmul.mubr.f32.gmra.mxu0 %v108
    %v110 = vpop.f32.mrf.mxu0
    %v111 = vadd.f32 0.0, %v110
    %v112 = vpop.f32.mrf.mxu0
    %v113 = vadd.f32 0.0, %v112
    %114 = vdwg.mxu0
    %115 = vmatprep.subr.mxu0 0.0
    %116 = vmatpush1.msra.mxu0 0.0
    %117 = vmatprep.subr.mxu0 0.0
    %118 = vmatpush1.msra.mxu0 0.0
    %119 = vmatprep.subr.mxu0 0.0
    %120 = vmatpush1.msra.mxu0 0.0
    %121 = vmatprep.subr.mxu0 0.0
    %122 = vmatpush1.msra.mxu0 0.0
    %123 = vmatprep.subr.mxu0 0.0
    %124 = vmatpush1.msra.mxu0 0.0
    %125 = vmatprep.subr.mxu0 0.0
    %126 = vmatpush1.msra.mxu0 0.0
    %127 = vmatprep.subr.mxu0 0.0
    %128 = vmatpush1.msra.mxu0 0.0
    %129 = vmatprep.subr.mxu0 0.0
    %130 = vmatpush1.msra.mxu0 0.0
    %131 = vmatprep.subr.mxu0 0.0
    %132 = vmatpush1.msra.mxu0 0.0
    %133 = vmatprep.subr.mxu0 0.0
    %134 = vmatpush1.msra.mxu0 0.0
    %135 = vmatprep.subr.mxu0 0.0
    %136 = vmatpush1.msra.mxu0 0.0
    %137 = vmatprep.subr.mxu0 0.0
    %138 = vmatpush1.msra.mxu0 0.0
    %139 = vmatprep.subr.mxu0 0.0
    %140 = vmatpush1.msra.mxu0 0.0
    %141 = vmatprep.subr.mxu0 0.0
    %142 = vmatpush1.msra.mxu0 0.0
    %143 = vmatprep.subr.mxu0 0.0
    %144 = vmatpush1.msra.mxu0 0.0
    %v145 = vand.u32 %v31, 4294901760
    %v146 = vsub.f32 %v31, %v145
    %v147 = vand.u32 %v146, 4294901760
    %v148 = vsub.f32 %v146, %v147
    %v149 = vand.u32 %v148, 4294901760
    %150 = vmatprep.subr.mxu0 %v149
    %v151 = vand.u32 %v30, 4294901760
    %v152 = vsub.f32 %v30, %v151
    %v153 = vand.u32 %v152, 4294901760
    %v154 = vsub.f32 %v152, %v153
    %v155 = vand.u32 %v154, 4294901760
    %156 = vmatpush1.msra.mxu0 %v155
    %157 = vmatprep.subr.mxu0 0.0
    %158 = vmatpush2.msra.mxu0 0.0
    %159 = vmatprep.subr.mxu0 0.0
    %160 = vmatpush2.msra.mxu0 0.0
    %161 = vmatprep.subr.mxu0 0.0
    %162 = vmatpush2.msra.mxu0 0.0
    %163 = vmatprep.subr.mxu0 0.0
    %164 = vmatpush2.msra.mxu0 0.0
    %165 = vmatprep.subr.mxu0 0.0
    %166 = vmatpush2.msra.mxu0 0.0
    %167 = vmatprep.subr.mxu0 0.0
    %168 = vmatpush2.msra.mxu0 0.0
    %169 = vmatprep.subr.mxu0 0.0
    %170 = vmatpush2.msra.mxu0 0.0
    %171 = vmatprep.subr.mxu0 0.0
    %172 = vmatpush2.msra.mxu0 0.0
    %173 = vmatprep.subr.mxu0 0.0
    %174 = vmatpush2.msra.mxu0 0.0
    %175 = vmatprep.subr.mxu0 0.0
    %176 = vmatpush2.msra.mxu0 0.0
    %177 = vmatprep.subr.mxu0 0.0
    %178 = vmatpush2.msra.mxu0 0.0
    %179 = vmatprep.subr.mxu0 0.0
    %180 = vmatpush2.msra.mxu0 0.0
    %181 = vmatprep.subr.mxu0 0.0
    %182 = vmatpush2.msra.mxu0 0.0
    %183 = vmatprep.subr.mxu0 0.0
    %184 = vmatpush2.msra.mxu0 0.0
    %185 = vmatprep.subr.mxu0 0.0
    %186 = vmatpush2.msra.mxu0 0.0
    %187 = vmatprep.subr.mxu0 0.0
    %188 = vmatpush2.msra.mxu0 0.0
    %189 = vmatprep.mubr.f32.mxu0 0.0
    %v190 = vand.u32 %v35, 4294901760
    %191 = vmatmul.mubr.f32.gmra.mxu0 %v190
    %v192 = vpop.f32.mrf.mxu0
    %v193 = vadd.f32 %v111, %v192
    %v194 = vpop.f32.mrf.mxu0
    %v195 = vadd.f32 %v113, %v194
    %196 = vdwg.mxu0
    %197 = vmatprep.subr.mxu0 0.0
    %198 = vmatpush1.msra.mxu0 0.0
    %199 = vmatprep.subr.mxu0 0.0
    %200 = vmatpush1.msra.mxu0 0.0
    %201 = vmatprep.subr.mxu0 0.0
    %202 = vmatpush1.msra.mxu0 0.0
    %203 = vmatprep.subr.mxu0 0.0
    %204 = vmatpush1.msra.mxu0 0.0
    %205 = vmatprep.subr.mxu0 0.0
    %206 = vmatpush1.msra.mxu0 0.0
    %207 = vmatprep.subr.mxu0 0.0
    %208 = vmatpush1.msra.mxu0 0.0
    %209 = vmatprep.subr.mxu0 0.0
    %210 = vmatpush1.msra.mxu0 0.0
    %211 = vmatprep.subr.mxu0 0.0
    %212 = vmatpush1.msra.mxu0 0.0
    %213 = vmatprep.subr.mxu0 0.0
    %214 = vmatpush1.msra.mxu0 0.0
    %215 = vmatprep.subr.mxu0 0.0
    %216 = vmatpush1.msra.mxu0 0.0
    %217 = vmatprep.subr.mxu0 0.0
    %218 = vmatpush1.msra.mxu0 0.0
    %219 = vmatprep.subr.mxu0 0.0
    %220 = vmatpush1.msra.mxu0 0.0
    %221 = vmatprep.subr.mxu0 0.0
    %222 = vmatpush1.msra.mxu0 0.0
    %223 = vmatprep.subr.mxu0 0.0
    %224 = vmatpush1.msra.mxu0 0.0
    %225 = vmatprep.subr.mxu0 0.0
    %226 = vmatpush1.msra.mxu0 0.0
    %v227 = vand.u32 %v31, 4294901760
    %v228 = vsub.f32 %v31, %v227
    %229 = vmatprep.subr.mxu0 %v228
    %v230 = vand.u32 %v30, 4294901760
    %v231 = vsub.f32 %v30, %v230
    %232 = vmatpush1.msra.mxu0 %v231
    %233 = vmatprep.subr.mxu0 0.0
    %234 = vmatpush2.msra.mxu0 0.0
    %235 = vmatprep.subr.mxu0 0.0
    %236 = vmatpush2.msra.mxu0 0.0
    %237 = vmatprep.subr.mxu0 0.0
    %238 = vmatpush2.msra.mxu0 0.0
    %239 = vmatprep.subr.mxu0 0.0
    %240 = vmatpush2.msra.mxu0 0.0
    %241 = vmatprep.subr.mxu0 0.0
    %242 = vmatpush2.msra.mxu0 0.0
    %243 = vmatprep.subr.mxu0 0.0
    %244 = vmatpush2.msra.mxu0 0.0
    %245 = vmatprep.subr.mxu0 0.0
    %246 = vmatpush2.msra.mxu0 0.0
    %247 = vmatprep.subr.mxu0 0.0
    %248 = vmatpush2.msra.mxu0 0.0
    %249 = vmatprep.subr.mxu0 0.0
    %250 = vmatpush2.msra.mxu0 0.0
    %251 = vmatprep.subr.mxu0 0.0
    %252 = vmatpush2.msra.mxu0 0.0
    %253 = vmatprep.subr.mxu0 0.0
    %254 = vmatpush2.msra.mxu0 0.0
    %255 = vmatprep.subr.mxu0 0.0
    %256 = vmatpush2.msra.mxu0 0.0
    %257 = vmatprep.subr.mxu0 0.0
    %258 = vmatpush2.msra.mxu0 0.0
    %259 = vmatprep.subr.mxu0 0.0
    %260 = vmatpush2.msra.mxu0 0.0
    %261 = vmatprep.subr.mxu0 0.0
    %262 = vmatpush2.msra.mxu0 0.0
    %263 = vmatprep.subr.mxu0 0.0
    %264 = vmatpush2.msra.mxu0 0.0
    %265 = vmatprep.mubr.f32.mxu0 0.0
    %v266 = vand.u32 %v35, 4294901760
    %v267 = vsub.f32 %v35, %v266
    %268 = vmatmul.mubr.f32.gmra.mxu0 %v267
    %v269 = vpop.f32.mrf.mxu0
    %v270 = vadd.f32 %v193, %v269
    %v271 = vpop.f32.mrf.mxu0
    %v272 = vadd.f32 %v195, %v271
    %273 = vdwg.mxu0
    %274 = vmatprep.subr.mxu0 0.0
    %275 = vmatpush1.msra.mxu0 0.0
    %276 = vmatprep.subr.mxu0 0.0
    %277 = vmatpush1.msra.mxu0 0.0
    %278 = vmatprep.subr.mxu0 0.0
    %279 = vmatpush1.msra.mxu0 0.0
    %280 = vmatprep.subr.mxu0 0.0
    %281 = vmatpush1.msra.mxu0 0.0
    %282 = vmatprep.subr.mxu0 0.0
    %283 = vmatpush1.msra.mxu0 0.0
    %284 = vmatprep.subr.mxu0 0.0
    %285 = vmatpush1.msra.mxu0 0.0
    %286 = vmatprep.subr.mxu0 0.0
    %287 = vmatpush1.msra.mxu0 0.0
    %288 = vmatprep.subr.mxu0 0.0
    %289 = vmatpush1.msra.mxu0 0.0
    %290 = vmatprep.subr.mxu0 0.0
    %291 = vmatpush1.msra.mxu0 0.0
    %292 = vmatprep.subr.mxu0 0.0
    %293 = vmatpush1.msra.mxu0 0.0
    %294 = vmatprep.subr.mxu0 0.0
    %295 = vmatpush1.msra.mxu0 0.0
    %296 = vmatprep.subr.mxu0 0.0
    %297 = vmatpush1.msra.mxu0 0.0
    %298 = vmatprep.subr.mxu0 0.0
    %299 = vmatpush1.msra.mxu0 0.0
    %300 = vmatprep.subr.mxu0 0.0
    %301 = vmatpush1.msra.mxu0 0.0
    %302 = vmatprep.subr.mxu0 0.0
    %303 = vmatpush1.msra.mxu0 0.0
    %v304 = vand.u32 %v31, 4294901760
    %305 = vmatprep.subr.mxu0 %v304
    %v306 = vand.u32 %v30, 4294901760
    %307 = vmatpush1.msra.mxu0 %v306
    %308 = vmatprep.subr.mxu0 0.0
    %309 = vmatpush2.msra.mxu0 0.0
    %310 = vmatprep.subr.mxu0 0.0
    %311 = vmatpush2.msra.mxu0 0.0
    %312 = vmatprep.subr.mxu0 0.0
    %313 = vmatpush2.msra.mxu0 0.0
    %314 = vmatprep.subr.mxu0 0.0
    %315 = vmatpush2.msra.mxu0 0.0
    %316 = vmatprep.subr.mxu0 0.0
    %317 = vmatpush2.msra.mxu0 0.0
    %318 = vmatprep.subr.mxu0 0.0
    %319 = vmatpush2.msra.mxu0 0.0
    %320 = vmatprep.subr.mxu0 0.0
    %321 = vmatpush2.msra.mxu0 0.0
    %322 = vmatprep.subr.mxu0 0.0
    %323 = vmatpush2.msra.mxu0 0.0
    %324 = vmatprep.subr.mxu0 0.0
    %325 = vmatpush2.msra.mxu0 0.0
    %326 = vmatprep.subr.mxu0 0.0
    %327 = vmatpush2.msra.mxu0 0.0
    %328 = vmatprep.subr.mxu0 0.0
    %329 = vmatpush2.msra.mxu0 0.0
    %330 = vmatprep.subr.mxu0 0.0
    %331 = vmatpush2.msra.mxu0 0.0
    %332 = vmatprep.subr.mxu0 0.0
    %333 = vmatpush2.msra.mxu0 0.0
    %334 = vmatprep.subr.mxu0 0.0
    %335 = vmatpush2.msra.mxu0 0.0
    %336 = vmatprep.subr.mxu0 0.0
    %337 = vmatpush2.msra.mxu0 0.0
    %338 = vmatprep.subr.mxu0 0.0
    %339 = vmatpush2.msra.mxu0 0.0
    %340 = vmatprep.mubr.f32.mxu0 0.0
    %v341 = vand.u32 %v35, 4294901760
    %v342 = vsub.f32 %v35, %v341
    %v343 = vand.u32 %v342, 4294901760
    %344 = vmatmul.mubr.f32.gmra.mxu0 %v343
    %v345 = vpop.f32.mrf.mxu0
    %v346 = vadd.f32 %v270, %v345
    %v347 = vpop.f32.mrf.mxu0
    %v348 = vadd.f32 %v272, %v347
    %349 = vdwg.mxu0
    %350 = vmatprep.subr.mxu0 0.0
    %351 = vmatpush1.msra.mxu0 0.0
    %352 = vmatprep.subr.mxu0 0.0
    %353 = vmatpush1.msra.mxu0 0.0
    %354 = vmatprep.subr.mxu0 0.0
    %355 = vmatpush1.msra.mxu0 0.0
    %356 = vmatprep.subr.mxu0 0.0
    %357 = vmatpush1.msra.mxu0 0.0
    %358 = vmatprep.subr.mxu0 0.0
    %359 = vmatpush1.msra.mxu0 0.0
    %360 = vmatprep.subr.mxu0 0.0
    %361 = vmatpush1.msra.mxu0 0.0
    %362 = vmatprep.subr.mxu0 0.0
    %363 = vmatpush1.msra.mxu0 0.0
    %364 = vmatprep.subr.mxu0 0.0
    %365 = vmatpush1.msra.mxu0 0.0
    %366 = vmatprep.subr.mxu0 0.0
    %367 = vmatpush1.msra.mxu0 0.0
    %368 = vmatprep.subr.mxu0 0.0
    %369 = vmatpush1.msra.mxu0 0.0
    %370 = vmatprep.subr.mxu0 0.0
    %371 = vmatpush1.msra.mxu0 0.0
    %372 = vmatprep.subr.mxu0 0.0
    %373 = vmatpush1.msra.mxu0 0.0
    %374 = vmatprep.subr.mxu0 0.0
    %375 = vmatpush1.msra.mxu0 0.0
    %376 = vmatprep.subr.mxu0 0.0
    %377 = vmatpush1.msra.mxu0 0.0
    %378 = vmatprep.subr.mxu0 0.0
    %379 = vmatpush1.msra.mxu0 0.0
    %v380 = vand.u32 %v31, 4294901760
    %v381 = vsub.f32 %v31, %v380
    %v382 = vand.u32 %v381, 4294901760
    %383 = vmatprep.subr.mxu0 %v382
    %v384 = vand.u32 %v30, 4294901760
    %v385 = vsub.f32 %v30, %v384
    %v386 = vand.u32 %v385, 4294901760
    %387 = vmatpush1.msra.mxu0 %v386
    %388 = vmatprep.subr.mxu0 0.0
    %389 = vmatpush2.msra.mxu0 0.0
    %390 = vmatprep.subr.mxu0 0.0
    %391 = vmatpush2.msra.mxu0 0.0
    %392 = vmatprep.subr.mxu0 0.0
    %393 = vmatpush2.msra.mxu0 0.0
    %394 = vmatprep.subr.mxu0 0.0
    %395 = vmatpush2.msra.mxu0 0.0
    %396 = vmatprep.subr.mxu0 0.0
    %397 = vmatpush2.msra.mxu0 0.0
    %398 = vmatprep.subr.mxu0 0.0
    %399 = vmatpush2.msra.mxu0 0.0
    %400 = vmatprep.subr.mxu0 0.0
    %401 = vmatpush2.msra.mxu0 0.0
    %402 = vmatprep.subr.mxu0 0.0
    %403 = vmatpush2.msra.mxu0 0.0
    %404 = vmatprep.subr.mxu0 0.0
    %405 = vmatpush2.msra.mxu0 0.0
    %406 = vmatprep.subr.mxu0 0.0
    %407 = vmatpush2.msra.mxu0 0.0
    %408 = vmatprep.subr.mxu0 0.0
    %409 = vmatpush2.msra.mxu0 0.0
    %410 = vmatprep.subr.mxu0 0.0
    %411 = vmatpush2.msra.mxu0 0.0
    %412 = vmatprep.subr.mxu0 0.0
    %413 = vmatpush2.msra.mxu0 0.0
    %414 = vmatprep.subr.mxu0 0.0
    %415 = vmatpush2.msra.mxu0 0.0
    %416 = vmatprep.subr.mxu0 0.0
    %417 = vmatpush2.msra.mxu0 0.0
    %418 = vmatprep.subr.mxu0 0.0
    %419 = vmatpush2.msra.mxu0 0.0
    %420 = vmatprep.mubr.f32.mxu0 0.0
    %v421 = vand.u32 %v35, 4294901760
    %422 = vmatmul.mubr.f32.gmra.mxu0 %v421
    %v423 = vpop.f32.mrf.mxu0
    %v424 = vadd.f32 %v346, %v423
    %v425 = vpop.f32.mrf.mxu0
    %v426 = vadd.f32 %v348, %v425
    %427 = vdwg.mxu0
    %428 = vmatprep.subr.mxu0 0.0
    %429 = vmatpush1.msra.mxu0 0.0
    %430 = vmatprep.subr.mxu0 0.0
    %431 = vmatpush1.msra.mxu0 0.0
    %432 = vmatprep.subr.mxu0 0.0
    %433 = vmatpush1.msra.mxu0 0.0
    %434 = vmatprep.subr.mxu0 0.0
    %435 = vmatpush1.msra.mxu0 0.0
    %436 = vmatprep.subr.mxu0 0.0
    %437 = vmatpush1.msra.mxu0 0.0
    %438 = vmatprep.subr.mxu0 0.0
    %439 = vmatpush1.msra.mxu0 0.0
    %440 = vmatprep.subr.mxu0 0.0
    %441 = vmatpush1.msra.mxu0 0.0
    %442 = vmatprep.subr.mxu0 0.0
    %443 = vmatpush1.msra.mxu0 0.0
    %444 = vmatprep.subr.mxu0 0.0
    %445 = vmatpush1.msra.mxu0 0.0
    %446 = vmatprep.subr.mxu0 0.0
    %447 = vmatpush1.msra.mxu0 0.0
    %448 = vmatprep.subr.mxu0 0.0
    %449 = vmatpush1.msra.mxu0 0.0
    %450 = vmatprep.subr.mxu0 0.0
    %451 = vmatpush1.msra.mxu0 0.0
    %452 = vmatprep.subr.mxu0 0.0
    %453 = vmatpush1.msra.mxu0 0.0
    %454 = vmatprep.subr.mxu0 0.0
    %455 = vmatpush1.msra.mxu0 0.0
    %456 = vmatprep.subr.mxu0 0.0
    %457 = vmatpush1.msra.mxu0 0.0
    %v458 = vand.u32 %v31, 4294901760
    %459 = vmatprep.subr.mxu0 %v458
    %v460 = vand.u32 %v30, 4294901760
    %461 = vmatpush1.msra.mxu0 %v460
    %462 = vmatprep.subr.mxu0 0.0
    %463 = vmatpush2.msra.mxu0 0.0
    %464 = vmatprep.subr.mxu0 0.0
    %465 = vmatpush2.msra.mxu0 0.0
    %466 = vmatprep.subr.mxu0 0.0
    %467 = vmatpush2.msra.mxu0 0.0
    %468 = vmatprep.subr.mxu0 0.0
    %469 = vmatpush2.msra.mxu0 0.0
    %470 = vmatprep.subr.mxu0 0.0
    %471 = vmatpush2.msra.mxu0 0.0
    %472 = vmatprep.subr.mxu0 0.0
    %473 = vmatpush2.msra.mxu0 0.0
    %474 = vmatprep.subr.mxu0 0.0
    %475 = vmatpush2.msra.mxu0 0.0
    %476 = vmatprep.subr.mxu0 0.0
    %477 = vmatpush2.msra.mxu0 0.0
    %478 = vmatprep.subr.mxu0 0.0
    %479 = vmatpush2.msra.mxu0 0.0
    %480 = vmatprep.subr.mxu0 0.0
    %481 = vmatpush2.msra.mxu0 0.0
    %482 = vmatprep.subr.mxu0 0.0
    %483 = vmatpush2.msra.mxu0 0.0
    %484 = vmatprep.subr.mxu0 0.0
    %485 = vmatpush2.msra.mxu0 0.0
    %486 = vmatprep.subr.mxu0 0.0
    %487 = vmatpush2.msra.mxu0 0.0
    %488 = vmatprep.subr.mxu0 0.0
    %489 = vmatpush2.msra.mxu0 0.0
    %490 = vmatprep.subr.mxu0 0.0
    %491 = vmatpush2.msra.mxu0 0.0
    %492 = vmatprep.subr.mxu0 0.0
    %493 = vmatpush2.msra.mxu0 0.0
    %494 = vmatprep.mubr.f32.mxu0 0.0
    %v495 = vand.u32 %v35, 4294901760
    %496 = vmatmul.mubr.f32.gmra.mxu0 %v495
    %v497 = vpop.f32.mrf.mxu0
    %v498 = vadd.f32 %v424, %v497
    %v499 = vpop.f32.mrf.mxu0
    %v500 = vadd.f32 %v426, %v499
    %501 = vdwg.mxu0
    %v502 = vxor.u32 %v498, 2147483648
    %v503 = vxor.u32 %v500, 2147483648
    %v504 = vmul.f32 %v502, 1.442695
    %v505 = vpow.pop %v504
    %v506 = vmul.f32 %v503, 1.442695
    %v507 = vpow.pop %v506
    %v508 = vadd.f32 %v505, 1.0
    %v509 = vadd.f32 %v507, 1.0
    %v510 = vrcp.pop %v508
    %v511 = vmul.f32 1.0, %v510
    %v512 = vrcp.pop %v509
    %v513 = vmul.f32 1.0, %v512
    %v514 = vld [vmem:[%s3] sm:$0xff]
    %vm515 = vcmask 15360
    %v517 = vsel %vm515, %v514, 0
    %vm519 = vcmask 1041408
    %v521 = vsel %vm519, %v511, 0
    %v524 = vsel %vm519, %v513, 0
    %526 = vmatprep.subr.mxu0 0.0
    %527 = vmatpush1.msra.mxu0 0.0
    %528 = vmatprep.subr.mxu0 0.0
    %529 = vmatpush1.msra.mxu0 0.0
    %530 = vmatprep.subr.mxu0 0.0
    %531 = vmatpush1.msra.mxu0 0.0
    %532 = vmatprep.subr.mxu0 0.0
    %533 = vmatpush1.msra.mxu0 0.0
    %534 = vmatprep.subr.mxu0 0.0
    %535 = vmatpush1.msra.mxu0 0.0
    %536 = vmatprep.subr.mxu0 0.0
    %537 = vmatpush1.msra.mxu0 0.0
    %538 = vmatprep.subr.mxu0 0.0
    %539 = vmatpush1.msra.mxu0 0.0
    %540 = vmatprep.subr.mxu0 0.0
    %541 = vmatpush1.msra.mxu0 0.0
    %542 = vmatprep.subr.mxu0 0.0
    %543 = vmatpush1.msra.mxu0 0.0
    %544 = vmatprep.subr.mxu0 0.0
    %545 = vmatpush1.msra.mxu0 0.0
    %546 = vmatprep.subr.mxu0 0.0
    %547 = vmatpush1.msra.mxu0 0.0
    %548 = vmatprep.subr.mxu0 0.0
    %549 = vmatpush1.msra.mxu0 0.0
    %550 = vmatprep.subr.mxu0 0.0
    %551 = vmatpush1.msra.mxu0 0.0
    %552 = vmatprep.subr.mxu0 0.0
    %553 = vmatpush1.msra.mxu0 0.0
    %554 = vmatprep.subr.mxu0 0.0
    %555 = vmatpush1.msra.mxu0 0.0
    %v556 = vand.u32 %v524, 4294901760
    %557 = vmatprep.subr.mxu0 %v556
    %v558 = vand.u32 %v521, 4294901760
    %559 = vmatpush1.msra.mxu0 %v558
    %560 = vmatprep.subr.mxu0 0.0
    %561 = vmatpush2.msra.mxu0 0.0
    %562 = vmatprep.subr.mxu0 0.0
    %563 = vmatpush2.msra.mxu0 0.0
    %564 = vmatprep.subr.mxu0 0.0
    %565 = vmatpush2.msra.mxu0 0.0
    %566 = vmatprep.subr.mxu0 0.0
    %567 = vmatpush2.msra.mxu0 0.0
    %568 = vmatprep.subr.mxu0 0.0
    %569 = vmatpush2.msra.mxu0 0.0
    %570 = vmatprep.subr.mxu0 0.0
    %571 = vmatpush2.msra.mxu0 0.0
    %572 = vmatprep.subr.mxu0 0.0
    %573 = vmatpush2.msra.mxu0 0.0
    %574 = vmatprep.subr.mxu0 0.0
    %575 = vmatpush2.msra.mxu0 0.0
    %576 = vmatprep.subr.mxu0 0.0
    %577 = vmatpush2.msra.mxu0 0.0
    %578 = vmatprep.subr.mxu0 0.0
    %579 = vmatpush2.msra.mxu0 0.0
    %580 = vmatprep.subr.mxu0 0.0
    %581 = vmatpush2.msra.mxu0 0.0
    %582 = vmatprep.subr.mxu0 0.0
    %583 = vmatpush2.msra.mxu0 0.0
    %584 = vmatprep.subr.mxu0 0.0
    %585 = vmatpush2.msra.mxu0 0.0
    %586 = vmatprep.subr.mxu0 0.0
    %587 = vmatpush2.msra.mxu0 0.0
    %588 = vmatprep.subr.mxu0 0.0
    %589 = vmatpush2.msra.mxu0 0.0
    %590 = vmatprep.subr.mxu0 0.0
    %591 = vmatpush2.msra.mxu0 0.0
    %592 = vmatprep.mubr.f32.mxu0 0.0
    %v593 = vand.u32 %v517, 4294901760
    %v594 = vsub.f32 %v517, %v593
    %v595 = vand.u32 %v594, 4294901760
    %v596 = vsub.f32 %v594, %v595
    %v597 = vand.u32 %v596, 4294901760
    %598 = vmatmul.mubr.f32.gmra.mxu0 %v597
    %v599 = vpop.f32.mrf.mxu0
    %v600 = vadd.f32 0.0, %v599
    %v601 = vpop.f32.mrf.mxu0
    %v602 = vadd.f32 0.0, %v601
    %603 = vdwg.mxu0
    %604 = vmatprep.subr.mxu0 0.0
    %605 = vmatpush1.msra.mxu0 0.0
    %606 = vmatprep.subr.mxu0 0.0
    %607 = vmatpush1.msra.mxu0 0.0
    %608 = vmatprep.subr.mxu0 0.0
    %609 = vmatpush1.msra.mxu0 0.0
    %610 = vmatprep.subr.mxu0 0.0
    %611 = vmatpush1.msra.mxu0 0.0
    %612 = vmatprep.subr.mxu0 0.0
    %613 = vmatpush1.msra.mxu0 0.0
    %614 = vmatprep.subr.mxu0 0.0
    %615 = vmatpush1.msra.mxu0 0.0
    %616 = vmatprep.subr.mxu0 0.0
    %617 = vmatpush1.msra.mxu0 0.0
    %618 = vmatprep.subr.mxu0 0.0
    %619 = vmatpush1.msra.mxu0 0.0
    %620 = vmatprep.subr.mxu0 0.0
    %621 = vmatpush1.msra.mxu0 0.0
    %622 = vmatprep.subr.mxu0 0.0
    %623 = vmatpush1.msra.mxu0 0.0
    %624 = vmatprep.subr.mxu0 0.0
    %625 = vmatpush1.msra.mxu0 0.0
    %626 = vmatprep.subr.mxu0 0.0
    %627 = vmatpush1.msra.mxu0 0.0
    %628 = vmatprep.subr.mxu0 0.0
    %629 = vmatpush1.msra.mxu0 0.0
    %630 = vmatprep.subr.mxu0 0.0
    %631 = vmatpush1.msra.mxu0 0.0
    %632 = vmatprep.subr.mxu0 0.0
    %633 = vmatpush1.msra.mxu0 0.0
    %v634 = vand.u32 %v524, 4294901760
    %v635 = vsub.f32 %v524, %v634
    %v636 = vand.u32 %v635, 4294901760
    %v637 = vsub.f32 %v635, %v636
    %v638 = vand.u32 %v637, 4294901760
    %639 = vmatprep.subr.mxu0 %v638
    %v640 = vand.u32 %v521, 4294901760
    %v641 = vsub.f32 %v521, %v640
    %v642 = vand.u32 %v641, 4294901760
    %v643 = vsub.f32 %v641, %v642
    %v644 = vand.u32 %v643, 4294901760
    %645 = vmatpush1.msra.mxu0 %v644
    %646 = vmatprep.subr.mxu0 0.0
    %647 = vmatpush2.msra.mxu0 0.0
    %648 = vmatprep.subr.mxu0 0.0
    %649 = vmatpush2.msra.mxu0 0.0
    %650 = vmatprep.subr.mxu0 0.0
    %651 = vmatpush2.msra.mxu0 0.0
    %652 = vmatprep.subr.mxu0 0.0
    %653 = vmatpush2.msra.mxu0 0.0
    %654 = vmatprep.subr.mxu0 0.0
    %655 = vmatpush2.msra.mxu0 0.0
    %656 = vmatprep.subr.mxu0 0.0
    %657 = vmatpush2.msra.mxu0 0.0
    %658 = vmatprep.subr.mxu0 0.0
    %659 = vmatpush2.msra.mxu0 0.0
    %660 = vmatprep.subr.mxu0 0.0
    %661 = vmatpush2.msra.mxu0 0.0
    %662 = vmatprep.subr.mxu0 0.0
    %663 = vmatpush2.msra.mxu0 0.0
    %664 = vmatprep.subr.mxu0 0.0
    %665 = vmatpush2.msra.mxu0 0.0
    %666 = vmatprep.subr.mxu0 0.0
    %667 = vmatpush2.msra.mxu0 0.0
    %668 = vmatprep.subr.mxu0 0.0
    %669 = vmatpush2.msra.mxu0 0.0
    %670 = vmatprep.subr.mxu0 0.0
    %671 = vmatpush2.msra.mxu0 0.0
    %672 = vmatprep.subr.mxu0 0.0
    %673 = vmatpush2.msra.mxu0 0.0
    %674 = vmatprep.subr.mxu0 0.0
    %675 = vmatpush2.msra.mxu0 0.0
    %676 = vmatprep.subr.mxu0 0.0
    %677 = vmatpush2.msra.mxu0 0.0
    %678 = vmatprep.mubr.f32.mxu0 0.0
    %v679 = vand.u32 %v517, 4294901760
    %680 = vmatmul.mubr.f32.gmra.mxu0 %v679
    %v681 = vpop.f32.mrf.mxu0
    %v682 = vadd.f32 %v600, %v681
    %v683 = vpop.f32.mrf.mxu0
    %v684 = vadd.f32 %v602, %v683
    %685 = vdwg.mxu0
    %686 = vmatprep.subr.mxu0 0.0
    %687 = vmatpush1.msra.mxu0 0.0
    %688 = vmatprep.subr.mxu0 0.0
    %689 = vmatpush1.msra.mxu0 0.0
    %690 = vmatprep.subr.mxu0 0.0
    %691 = vmatpush1.msra.mxu0 0.0
    %692 = vmatprep.subr.mxu0 0.0
    %693 = vmatpush1.msra.mxu0 0.0
    %694 = vmatprep.subr.mxu0 0.0
    %695 = vmatpush1.msra.mxu0 0.0
    %696 = vmatprep.subr.mxu0 0.0
    %697 = vmatpush1.msra.mxu0 0.0
    %698 = vmatprep.subr.mxu0 0.0
    %699 = vmatpush1.msra.mxu0 0.0
    %700 = vmatprep.subr.mxu0 0.0
    %701 = vmatpush1.msra.mxu0 0.0
    %702 = vmatprep.subr.mxu0 0.0
    %703 = vmatpush1.msra.mxu0 0.0
    %704 = vmatprep.subr.mxu0 0.0
    %705 = vmatpush1.msra.mxu0 0.0
    %706 = vmatprep.subr.mxu0 0.0
    %707 = vmatpush1.msra.mxu0 0.0
    %708 = vmatprep.subr.mxu0 0.0
    %709 = vmatpush1.msra.mxu0 0.0
    %710 = vmatprep.subr.mxu0 0.0
    %711 = vmatpush1.msra.mxu0 0.0
    %712 = vmatprep.subr.mxu0 0.0
    %713 = vmatpush1.msra.mxu0 0.0
    %714 = vmatprep.subr.mxu0 0.0
    %715 = vmatpush1.msra.mxu0 0.0
    %v716 = vand.u32 %v524, 4294901760
    %v717 = vsub.f32 %v524, %v716
    %718 = vmatprep.subr.mxu0 %v717
    %v719 = vand.u32 %v521, 4294901760
    %v720 = vsub.f32 %v521, %v719
    %721 = vmatpush1.msra.mxu0 %v720
    %722 = vmatprep.subr.mxu0 0.0
    %723 = vmatpush2.msra.mxu0 0.0
    %724 = vmatprep.subr.mxu0 0.0
    %725 = vmatpush2.msra.mxu0 0.0
    %726 = vmatprep.subr.mxu0 0.0
    %727 = vmatpush2.msra.mxu0 0.0
    %728 = vmatprep.subr.mxu0 0.0
    %729 = vmatpush2.msra.mxu0 0.0
    %730 = vmatprep.subr.mxu0 0.0
    %731 = vmatpush2.msra.mxu0 0.0
    %732 = vmatprep.subr.mxu0 0.0
    %733 = vmatpush2.msra.mxu0 0.0
    %734 = vmatprep.subr.mxu0 0.0
    %735 = vmatpush2.msra.mxu0 0.0
    %736 = vmatprep.subr.mxu0 0.0
    %737 = vmatpush2.msra.mxu0 0.0
    %738 = vmatprep.subr.mxu0 0.0
    %739 = vmatpush2.msra.mxu0 0.0
    %740 = vmatprep.subr.mxu0 0.0
    %741 = vmatpush2.msra.mxu0 0.0
    %742 = vmatprep.subr.mxu0 0.0
    %743 = vmatpush2.msra.mxu0 0.0
    %744 = vmatprep.subr.mxu0 0.0
    %745 = vmatpush2.msra.mxu0 0.0
    %746 = vmatprep.subr.mxu0 0.0
    %747 = vmatpush2.msra.mxu0 0.0
    %748 = vmatprep.subr.mxu0 0.0
    %749 = vmatpush2.msra.mxu0 0.0
    %750 = vmatprep.subr.mxu0 0.0
    %751 = vmatpush2.msra.mxu0 0.0
    %752 = vmatprep.subr.mxu0 0.0
    %753 = vmatpush2.msra.mxu0 0.0
    %754 = vmatprep.mubr.f32.mxu0 0.0
    %v755 = vand.u32 %v517, 4294901760
    %v756 = vsub.f32 %v517, %v755
    %757 = vmatmul.mubr.f32.gmra.mxu0 %v756
    %v758 = vpop.f32.mrf.mxu0
    %v759 = vadd.f32 %v682, %v758
    %v760 = vpop.f32.mrf.mxu0
    %v761 = vadd.f32 %v684, %v760
    %762 = vdwg.mxu0
    %763 = vmatprep.subr.mxu0 0.0
    %764 = vmatpush1.msra.mxu0 0.0
    %765 = vmatprep.subr.mxu0 0.0
    %766 = vmatpush1.msra.mxu0 0.0
    %767 = vmatprep.subr.mxu0 0.0
    %768 = vmatpush1.msra.mxu0 0.0
    %769 = vmatprep.subr.mxu0 0.0
    %770 = vmatpush1.msra.mxu0 0.0
    %771 = vmatprep.subr.mxu0 0.0
    %772 = vmatpush1.msra.mxu0 0.0
    %773 = vmatprep.subr.mxu0 0.0
    %774 = vmatpush1.msra.mxu0 0.0
    %775 = vmatprep.subr.mxu0 0.0
    %776 = vmatpush1.msra.mxu0 0.0
    %777 = vmatprep.subr.mxu0 0.0
    %778 = vmatpush1.msra.mxu0 0.0
    %779 = vmatprep.subr.mxu0 0.0
    %780 = vmatpush1.msra.mxu0 0.0
    %781 = vmatprep.subr.mxu0 0.0
    %782 = vmatpush1.msra.mxu0 0.0
    %783 = vmatprep.subr.mxu0 0.0
    %784 = vmatpush1.msra.mxu0 0.0
    %785 = vmatprep.subr.mxu0 0.0
    %786 = vmatpush1.msra.mxu0 0.0
    %787 = vmatprep.subr.mxu0 0.0
    %788 = vmatpush1.msra.mxu0 0.0
    %789 = vmatprep.subr.mxu0 0.0
    %790 = vmatpush1.msra.mxu0 0.0
    %791 = vmatprep.subr.mxu0 0.0
    %792 = vmatpush1.msra.mxu0 0.0
    %v793 = vand.u32 %v524, 4294901760
    %794 = vmatprep.subr.mxu0 %v793
    %v795 = vand.u32 %v521, 4294901760
    %796 = vmatpush1.msra.mxu0 %v795
    %797 = vmatprep.subr.mxu0 0.0
    %798 = vmatpush2.msra.mxu0 0.0
    %799 = vmatprep.subr.mxu0 0.0
    %800 = vmatpush2.msra.mxu0 0.0
    %801 = vmatprep.subr.mxu0 0.0
    %802 = vmatpush2.msra.mxu0 0.0
    %803 = vmatprep.subr.mxu0 0.0
    %804 = vmatpush2.msra.mxu0 0.0
    %805 = vmatprep.subr.mxu0 0.0
    %806 = vmatpush2.msra.mxu0 0.0
    %807 = vmatprep.subr.mxu0 0.0
    %808 = vmatpush2.msra.mxu0 0.0
    %809 = vmatprep.subr.mxu0 0.0
    %810 = vmatpush2.msra.mxu0 0.0
    %811 = vmatprep.subr.mxu0 0.0
    %812 = vmatpush2.msra.mxu0 0.0
    %813 = vmatprep.subr.mxu0 0.0
    %814 = vmatpush2.msra.mxu0 0.0
    %815 = vmatprep.subr.mxu0 0.0
    %816 = vmatpush2.msra.mxu0 0.0
    %817 = vmatprep.subr.mxu0 0.0
    %818 = vmatpush2.msra.mxu0 0.0
    %819 = vmatprep.subr.mxu0 0.0
    %820 = vmatpush2.msra.mxu0 0.0
    %821 = vmatprep.subr.mxu0 0.0
    %822 = vmatpush2.msra.mxu0 0.0
    %823 = vmatprep.subr.mxu0 0.0
    %824 = vmatpush2.msra.mxu0 0.0
    %825 = vmatprep.subr.mxu0 0.0
    %826 = vmatpush2.msra.mxu0 0.0
    %827 = vmatprep.subr.mxu0 0.0
    %828 = vmatpush2.msra.mxu0 0.0
    %829 = vmatprep.mubr.f32.mxu0 0.0
    %v830 = vand.u32 %v517, 4294901760
    %v831 = vsub.f32 %v517, %v830
    %v832 = vand.u32 %v831, 4294901760
    %833 = vmatmul.mubr.f32.gmra.mxu0 %v832
    %v834 = vpop.f32.mrf.mxu0
    %v835 = vadd.f32 %v759, %v834
    %v836 = vpop.f32.mrf.mxu0
    %v837 = vadd.f32 %v761, %v836
    %838 = vdwg.mxu0
    %839 = vmatprep.subr.mxu0 0.0
    %840 = vmatpush1.msra.mxu0 0.0
    %841 = vmatprep.subr.mxu0 0.0
    %842 = vmatpush1.msra.mxu0 0.0
    %843 = vmatprep.subr.mxu0 0.0
    %844 = vmatpush1.msra.mxu0 0.0
    %845 = vmatprep.subr.mxu0 0.0
    %846 = vmatpush1.msra.mxu0 0.0
    %847 = vmatprep.subr.mxu0 0.0
    %848 = vmatpush1.msra.mxu0 0.0
    %849 = vmatprep.subr.mxu0 0.0
    %850 = vmatpush1.msra.mxu0 0.0
    %851 = vmatprep.subr.mxu0 0.0
    %852 = vmatpush1.msra.mxu0 0.0
    %853 = vmatprep.subr.mxu0 0.0
    %854 = vmatpush1.msra.mxu0 0.0
    %855 = vmatprep.subr.mxu0 0.0
    %856 = vmatpush1.msra.mxu0 0.0
    %857 = vmatprep.subr.mxu0 0.0
    %858 = vmatpush1.msra.mxu0 0.0
    %859 = vmatprep.subr.mxu0 0.0
    %860 = vmatpush1.msra.mxu0 0.0
    %861 = vmatprep.subr.mxu0 0.0
    %862 = vmatpush1.msra.mxu0 0.0
    %863 = vmatprep.subr.mxu0 0.0
    %864 = vmatpush1.msra.mxu0 0.0
    %865 = vmatprep.subr.mxu0 0.0
    %866 = vmatpush1.msra.mxu0 0.0
    %867 = vmatprep.subr.mxu0 0.0
    %868 = vmatpush1.msra.mxu0 0.0
    %v869 = vand.u32 %v524, 4294901760
    %v870 = vsub.f32 %v524, %v869
    %v871 = vand.u32 %v870, 4294901760
    %872 = vmatprep.subr.mxu0 %v871
    %v873 = vand.u32 %v521, 4294901760
    %v874 = vsub.f32 %v521, %v873
    %v875 = vand.u32 %v874, 4294901760
    %876 = vmatpush1.msra.mxu0 %v875
    %877 = vmatprep.subr.mxu0 0.0
    %878 = vmatpush2.msra.mxu0 0.0
    %879 = vmatprep.subr.mxu0 0.0
    %880 = vmatpush2.msra.mxu0 0.0
    %881 = vmatprep.subr.mxu0 0.0
    %882 = vmatpush2.msra.mxu0 0.0
    %883 = vmatprep.subr.mxu0 0.0
    %884 = vmatpush2.msra.mxu0 0.0
    %885 = vmatprep.subr.mxu0 0.0
    %886 = vmatpush2.msra.mxu0 0.0
    %887 = vmatprep.subr.mxu0 0.0
    %888 = vmatpush2.msra.mxu0 0.0
    %889 = vmatprep.subr.mxu0 0.0
    %890 = vmatpush2.msra.mxu0 0.0
    %891 = vmatprep.subr.mxu0 0.0
    %892 = vmatpush2.msra.mxu0 0.0
    %893 = vmatprep.subr.mxu0 0.0
    %894 = vmatpush2.msra.mxu0 0.0
    %895 = vmatprep.subr.mxu0 0.0
    %896 = vmatpush2.msra.mxu0 0.0
    %897 = vmatprep.subr.mxu0 0.0
    %898 = vmatpush2.msra.mxu0 0.0
    %899 = vmatprep.subr.mxu0 0.0
    %900 = vmatpush2.msra.mxu0 0.0
    %901 = vmatprep.subr.mxu0 0.0
    %902 = vmatpush2.msra.mxu0 0.0
    %903 = vmatprep.subr.mxu0 0.0
    %904 = vmatpush2.msra.mxu0 0.0
    %905 = vmatprep.subr.mxu0 0.0
    %906 = vmatpush2.msra.mxu0 0.0
    %907 = vmatprep.subr.mxu0 0.0
    %908 = vmatpush2.msra.mxu0 0.0
    %909 = vmatprep.mubr.f32.mxu0 0.0
    %v910 = vand.u32 %v517, 4294901760
    %911 = vmatmul.mubr.f32.gmra.mxu0 %v910
    %v912 = vpop.f32.mrf.mxu0
    %v913 = vadd.f32 %v835, %v912
    %v914 = vpop.f32.mrf.mxu0
    %v915 = vadd.f32 %v837, %v914
    %916 = vdwg.mxu0
    %917 = vmatprep.subr.mxu0 0.0
    %918 = vmatpush1.msra.mxu0 0.0
    %919 = vmatprep.subr.mxu0 0.0
    %920 = vmatpush1.msra.mxu0 0.0
    %921 = vmatprep.subr.mxu0 0.0
    %922 = vmatpush1.msra.mxu0 0.0
    %923 = vmatprep.subr.mxu0 0.0
    %924 = vmatpush1.msra.mxu0 0.0
    %925 = vmatprep.subr.mxu0 0.0
    %926 = vmatpush1.msra.mxu0 0.0
    %927 = vmatprep.subr.mxu0 0.0
    %928 = vmatpush1.msra.mxu0 0.0
    %929 = vmatprep.subr.mxu0 0.0
    %930 = vmatpush1.msra.mxu0 0.0
    %931 = vmatprep.subr.mxu0 0.0
    %932 = vmatpush1.msra.mxu0 0.0
    %933 = vmatprep.subr.mxu0 0.0
    %934 = vmatpush1.msra.mxu0 0.0
    %935 = vmatprep.subr.mxu0 0.0
    %936 = vmatpush1.msra.mxu0 0.0
    %937 = vmatprep.subr.mxu0 0.0
    %938 = vmatpush1.msra.mxu0 0.0
    %939 = vmatprep.subr.mxu0 0.0
    %940 = vmatpush1.msra.mxu0 0.0
    %941 = vmatprep.subr.mxu0 0.0
    %942 = vmatpush1.msra.mxu0 0.0
    %943 = vmatprep.subr.mxu0 0.0
    %944 = vmatpush1.msra.mxu0 0.0
    %945 = vmatprep.subr.mxu0 0.0
    %946 = vmatpush1.msra.mxu0 0.0
    %v947 = vand.u32 %v524, 4294901760
    %948 = vmatprep.subr.mxu0 %v947
    %v949 = vand.u32 %v521, 4294901760
    %950 = vmatpush1.msra.mxu0 %v949
    %951 = vmatprep.subr.mxu0 0.0
    %952 = vmatpush2.msra.mxu0 0.0
    %953 = vmatprep.subr.mxu0 0.0
    %954 = vmatpush2.msra.mxu0 0.0
    %955 = vmatprep.subr.mxu0 0.0
    %956 = vmatpush2.msra.mxu0 0.0
    %957 = vmatprep.subr.mxu0 0.0
    %958 = vmatpush2.msra.mxu0 0.0
    %959 = vmatprep.subr.mxu0 0.0
    %960 = vmatpush2.msra.mxu0 0.0
    %961 = vmatprep.subr.mxu0 0.0
    %962 = vmatpush2.msra.mxu0 0.0
    %963 = vmatprep.subr.mxu0 0.0
    %964 = vmatpush2.msra.mxu0 0.0
    %965 = vmatprep.subr.mxu0 0.0
    %966 = vmatpush2.msra.mxu0 0.0
    %967 = vmatprep.subr.mxu0 0.0
    %968 = vmatpush2.msra.mxu0 0.0
    %969 = vmatprep.subr.mxu0 0.0
    %970 = vmatpush2.msra.mxu0 0.0
    %971 = vmatprep.subr.mxu0 0.0
    %972 = vmatpush2.msra.mxu0 0.0
    %973 = vmatprep.subr.mxu0 0.0
    %974 = vmatpush2.msra.mxu0 0.0
    %975 = vmatprep.subr.mxu0 0.0
    %976 = vmatpush2.msra.mxu0 0.0
    %977 = vmatprep.subr.mxu0 0.0
    %978 = vmatpush2.msra.mxu0 0.0
    %979 = vmatprep.subr.mxu0 0.0
    %980 = vmatpush2.msra.mxu0 0.0
    %981 = vmatprep.subr.mxu0 0.0
    %982 = vmatpush2.msra.mxu0 0.0
    %983 = vmatprep.mubr.f32.mxu0 0.0
    %v984 = vand.u32 %v517, 4294901760
    %985 = vmatmul.mubr.f32.gmra.mxu0 %v984
    %v986 = vpop.f32.mrf.mxu0
    %v987 = vadd.f32 %v913, %v986
    %v988 = vpop.f32.mrf.mxu0
    %v989 = vadd.f32 %v915, %v988
    %990 = vdwg.mxu0
    %v991 = vadd.f32 %v30, %v31
    %992 = vadd.xlane.f32.xlu0 %v991
    %v993 = vpop.xlane.xlu0 %992
    %v994 = vmul.f32 %v993, 0.00390625
    %v995 = vld [vmem:[%s2] sm:$0x3]
    %v997 = vsel %vm33, %v995, 0
    %999 = vmatprep.subr.mxu0 0.0
    %1000 = vmatpush1.msra.mxu0 0.0
    %1001 = vmatprep.subr.mxu0 0.0
    %1002 = vmatpush1.msra.mxu0 0.0
    %1003 = vmatprep.subr.mxu0 0.0
    %1004 = vmatpush1.msra.mxu0 0.0
    %1005 = vmatprep.subr.mxu0 0.0
    %1006 = vmatpush1.msra.mxu0 0.0
    %1007 = vmatprep.subr.mxu0 0.0
    %1008 = vmatpush1.msra.mxu0 0.0
    %1009 = vmatprep.subr.mxu0 0.0
    %1010 = vmatpush1.msra.mxu0 0.0
    %1011 = vmatprep.subr.mxu0 0.0
    %1012 = vmatpush1.msra.mxu0 0.0
    %1013 = vmatprep.subr.mxu0 0.0
    %1014 = vmatpush1.msra.mxu0 0.0
    %1015 = vmatprep.subr.mxu0 0.0
    %1016 = vmatpush1.msra.mxu0 0.0
    %1017 = vmatprep.subr.mxu0 0.0
    %1018 = vmatpush1.msra.mxu0 0.0
    %1019 = vmatprep.subr.mxu0 0.0
    %1020 = vmatpush1.msra.mxu0 0.0
    %1021 = vmatprep.subr.mxu0 0.0
    %1022 = vmatpush1.msra.mxu0 0.0
    %1023 = vmatprep.subr.mxu0 0.0
    %1024 = vmatpush1.msra.mxu0 0.0
    %1025 = vmatprep.subr.mxu0 0.0
    %1026 = vmatpush1.msra.mxu0 0.0
    %1027 = vmatprep.subr.mxu0 0.0
    %1028 = vmatpush1.msra.mxu0 0.0
    %1029 = vmatprep.subr.mxu0 0.0
    %v1030 = vand.u32 %v994, 4294901760
    %1031 = vmatpush1.msra.mxu0 %v1030
    %1032 = vmatprep.subr.mxu0 0.0
    %1033 = vmatpush2.msra.mxu0 0.0
    %1034 = vmatprep.subr.mxu0 0.0
    %1035 = vmatpush2.msra.mxu0 0.0
    %1036 = vmatprep.subr.mxu0 0.0
    %1037 = vmatpush2.msra.mxu0 0.0
    %1038 = vmatprep.subr.mxu0 0.0
    %1039 = vmatpush2.msra.mxu0 0.0
    %1040 = vmatprep.subr.mxu0 0.0
    %1041 = vmatpush2.msra.mxu0 0.0
    %1042 = vmatprep.subr.mxu0 0.0
    %1043 = vmatpush2.msra.mxu0 0.0
    %1044 = vmatprep.subr.mxu0 0.0
    %1045 = vmatpush2.msra.mxu0 0.0
    %1046 = vmatprep.subr.mxu0 0.0
    %1047 = vmatpush2.msra.mxu0 0.0
    %1048 = vmatprep.subr.mxu0 0.0
    %1049 = vmatpush2.msra.mxu0 0.0
    %1050 = vmatprep.subr.mxu0 0.0
    %1051 = vmatpush2.msra.mxu0 0.0
    %1052 = vmatprep.subr.mxu0 0.0
    %1053 = vmatpush2.msra.mxu0 0.0
    %1054 = vmatprep.subr.mxu0 0.0
    %1055 = vmatpush2.msra.mxu0 0.0
    %1056 = vmatprep.subr.mxu0 0.0
    %1057 = vmatpush2.msra.mxu0 0.0
    %1058 = vmatprep.subr.mxu0 0.0
    %1059 = vmatpush2.msra.mxu0 0.0
    %1060 = vmatprep.subr.mxu0 0.0
    %1061 = vmatpush2.msra.mxu0 0.0
    %1062 = vmatprep.subr.mxu0 0.0
    %1063 = vmatpush2.msra.mxu0 0.0
    %1064 = vmatprep.mubr.f32.mxu0 0.0
    %v1065 = vand.u32 %v997, 4294901760
    %v1066 = vsub.f32 %v997, %v1065
    %v1067 = vand.u32 %v1066, 4294901760
    %v1068 = vsub.f32 %v1066, %v1067
    %v1069 = vand.u32 %v1068, 4294901760
    %1070 = vmatmul.mubr.f32.gmra.mxu0 %v1069
    %v1071 = vpop.f32.mrf.mxu0
    %v1072 = vadd.f32 0.0, %v1071
    %v1073 = vpop.f32.mrf.mxu0
    %1074 = vdwg.mxu0
    %1075 = vmatprep.subr.mxu0 0.0
    %1076 = vmatpush1.msra.mxu0 0.0
    %1077 = vmatprep.subr.mxu0 0.0
    %1078 = vmatpush1.msra.mxu0 0.0
    %1079 = vmatprep.subr.mxu0 0.0
    %1080 = vmatpush1.msra.mxu0 0.0
    %1081 = vmatprep.subr.mxu0 0.0
    %1082 = vmatpush1.msra.mxu0 0.0
    %1083 = vmatprep.subr.mxu0 0.0
    %1084 = vmatpush1.msra.mxu0 0.0
    %1085 = vmatprep.subr.mxu0 0.0
    %1086 = vmatpush1.msra.mxu0 0.0
    %1087 = vmatprep.subr.mxu0 0.0
    %1088 = vmatpush1.msra.mxu0 0.0
    %1089 = vmatprep.subr.mxu0 0.0
    %1090 = vmatpush1.msra.mxu0 0.0
    %1091 = vmatprep.subr.mxu0 0.0
    %1092 = vmatpush1.msra.mxu0 0.0
    %1093 = vmatprep.subr.mxu0 0.0
    %1094 = vmatpush1.msra.mxu0 0.0
    %1095 = vmatprep.subr.mxu0 0.0
    %1096 = vmatpush1.msra.mxu0 0.0
    %1097 = vmatprep.subr.mxu0 0.0
    %1098 = vmatpush1.msra.mxu0 0.0
    %1099 = vmatprep.subr.mxu0 0.0
    %1100 = vmatpush1.msra.mxu0 0.0
    %1101 = vmatprep.subr.mxu0 0.0
    %1102 = vmatpush1.msra.mxu0 0.0
    %1103 = vmatprep.subr.mxu0 0.0
    %1104 = vmatpush1.msra.mxu0 0.0
    %1105 = vmatprep.subr.mxu0 0.0
    %v1106 = vand.u32 %v994, 4294901760
    %v1107 = vsub.f32 %v994, %v1106
    %v1108 = vand.u32 %v1107, 4294901760
    %v1109 = vsub.f32 %v1107, %v1108
    %v1110 = vand.u32 %v1109, 4294901760
    %1111 = vmatpush1.msra.mxu0 %v1110
    %1112 = vmatprep.subr.mxu0 0.0
    %1113 = vmatpush2.msra.mxu0 0.0
    %1114 = vmatprep.subr.mxu0 0.0
    %1115 = vmatpush2.msra.mxu0 0.0
    %1116 = vmatprep.subr.mxu0 0.0
    %1117 = vmatpush2.msra.mxu0 0.0
    %1118 = vmatprep.subr.mxu0 0.0
    %1119 = vmatpush2.msra.mxu0 0.0
    %1120 = vmatprep.subr.mxu0 0.0
    %1121 = vmatpush2.msra.mxu0 0.0
    %1122 = vmatprep.subr.mxu0 0.0
    %1123 = vmatpush2.msra.mxu0 0.0
    %1124 = vmatprep.subr.mxu0 0.0
    %1125 = vmatpush2.msra.mxu0 0.0
    %1126 = vmatprep.subr.mxu0 0.0
    %1127 = vmatpush2.msra.mxu0 0.0
    %1128 = vmatprep.subr.mxu0 0.0
    %1129 = vmatpush2.msra.mxu0 0.0
    %1130 = vmatprep.subr.mxu0 0.0
    %1131 = vmatpush2.msra.mxu0 0.0
    %1132 = vmatprep.subr.mxu0 0.0
    %1133 = vmatpush2.msra.mxu0 0.0
    %1134 = vmatprep.subr.mxu0 0.0
    %1135 = vmatpush2.msra.mxu0 0.0
    %1136 = vmatprep.subr.mxu0 0.0
    %1137 = vmatpush2.msra.mxu0 0.0
    %1138 = vmatprep.subr.mxu0 0.0
    %1139 = vmatpush2.msra.mxu0 0.0
    %1140 = vmatprep.subr.mxu0 0.0
    %1141 = vmatpush2.msra.mxu0 0.0
    %1142 = vmatprep.subr.mxu0 0.0
    %1143 = vmatpush2.msra.mxu0 0.0
    %1144 = vmatprep.mubr.f32.mxu0 0.0
    %v1145 = vand.u32 %v997, 4294901760
    %1146 = vmatmul.mubr.f32.gmra.mxu0 %v1145
    %v1147 = vpop.f32.mrf.mxu0
    %v1148 = vadd.f32 %v1072, %v1147
    %v1149 = vpop.f32.mrf.mxu0
    %1150 = vdwg.mxu0
    %1151 = vmatprep.subr.mxu0 0.0
    %1152 = vmatpush1.msra.mxu0 0.0
    %1153 = vmatprep.subr.mxu0 0.0
    %1154 = vmatpush1.msra.mxu0 0.0
    %1155 = vmatprep.subr.mxu0 0.0
    %1156 = vmatpush1.msra.mxu0 0.0
    %1157 = vmatprep.subr.mxu0 0.0
    %1158 = vmatpush1.msra.mxu0 0.0
    %1159 = vmatprep.subr.mxu0 0.0
    %1160 = vmatpush1.msra.mxu0 0.0
    %1161 = vmatprep.subr.mxu0 0.0
    %1162 = vmatpush1.msra.mxu0 0.0
    %1163 = vmatprep.subr.mxu0 0.0
    %1164 = vmatpush1.msra.mxu0 0.0
    %1165 = vmatprep.subr.mxu0 0.0
    %1166 = vmatpush1.msra.mxu0 0.0
    %1167 = vmatprep.subr.mxu0 0.0
    %1168 = vmatpush1.msra.mxu0 0.0
    %1169 = vmatprep.subr.mxu0 0.0
    %1170 = vmatpush1.msra.mxu0 0.0
    %1171 = vmatprep.subr.mxu0 0.0
    %1172 = vmatpush1.msra.mxu0 0.0
    %1173 = vmatprep.subr.mxu0 0.0
    %1174 = vmatpush1.msra.mxu0 0.0
    %1175 = vmatprep.subr.mxu0 0.0
    %1176 = vmatpush1.msra.mxu0 0.0
    %1177 = vmatprep.subr.mxu0 0.0
    %1178 = vmatpush1.msra.mxu0 0.0
    %1179 = vmatprep.subr.mxu0 0.0
    %1180 = vmatpush1.msra.mxu0 0.0
    %1181 = vmatprep.subr.mxu0 0.0
    %v1182 = vand.u32 %v994, 4294901760
    %v1183 = vsub.f32 %v994, %v1182
    %1184 = vmatpush1.msra.mxu0 %v1183
    %1185 = vmatprep.subr.mxu0 0.0
    %1186 = vmatpush2.msra.mxu0 0.0
    %1187 = vmatprep.subr.mxu0 0.0
    %1188 = vmatpush2.msra.mxu0 0.0
    %1189 = vmatprep.subr.mxu0 0.0
    %1190 = vmatpush2.msra.mxu0 0.0
    %1191 = vmatprep.subr.mxu0 0.0
    %1192 = vmatpush2.msra.mxu0 0.0
    %1193 = vmatprep.subr.mxu0 0.0
    %1194 = vmatpush2.msra.mxu0 0.0
    %1195 = vmatprep.subr.mxu0 0.0
    %1196 = vmatpush2.msra.mxu0 0.0
    %1197 = vmatprep.subr.mxu0 0.0
    %1198 = vmatpush2.msra.mxu0 0.0
    %1199 = vmatprep.subr.mxu0 0.0
    %1200 = vmatpush2.msra.mxu0 0.0
    %1201 = vmatprep.subr.mxu0 0.0
    %1202 = vmatpush2.msra.mxu0 0.0
    %1203 = vmatprep.subr.mxu0 0.0
    %1204 = vmatpush2.msra.mxu0 0.0
    %1205 = vmatprep.subr.mxu0 0.0
    %1206 = vmatpush2.msra.mxu0 0.0
    %1207 = vmatprep.subr.mxu0 0.0
    %1208 = vmatpush2.msra.mxu0 0.0
    %1209 = vmatprep.subr.mxu0 0.0
    %1210 = vmatpush2.msra.mxu0 0.0
    %1211 = vmatprep.subr.mxu0 0.0
    %1212 = vmatpush2.msra.mxu0 0.0
    %1213 = vmatprep.subr.mxu0 0.0
    %1214 = vmatpush2.msra.mxu0 0.0
    %1215 = vmatprep.subr.mxu0 0.0
    %1216 = vmatpush2.msra.mxu0 0.0
    %1217 = vmatprep.mubr.f32.mxu0 0.0
    %v1218 = vand.u32 %v997, 4294901760
    %v1219 = vsub.f32 %v997, %v1218
    %1220 = vmatmul.mubr.f32.gmra.mxu0 %v1219
    %v1221 = vpop.f32.mrf.mxu0
    %v1222 = vadd.f32 %v1148, %v1221
    %v1223 = vpop.f32.mrf.mxu0
    %1224 = vdwg.mxu0
    %1225 = vmatprep.subr.mxu0 0.0
    %1226 = vmatpush1.msra.mxu0 0.0
    %1227 = vmatprep.subr.mxu0 0.0
    %1228 = vmatpush1.msra.mxu0 0.0
    %1229 = vmatprep.subr.mxu0 0.0
    %1230 = vmatpush1.msra.mxu0 0.0
    %1231 = vmatprep.subr.mxu0 0.0
    %1232 = vmatpush1.msra.mxu0 0.0
    %1233 = vmatprep.subr.mxu0 0.0
    %1234 = vmatpush1.msra.mxu0 0.0
    %1235 = vmatprep.subr.mxu0 0.0
    %1236 = vmatpush1.msra.mxu0 0.0
    %1237 = vmatprep.subr.mxu0 0.0
    %1238 = vmatpush1.msra.mxu0 0.0
    %1239 = vmatprep.subr.mxu0 0.0
    %1240 = vmatpush1.msra.mxu0 0.0
    %1241 = vmatprep.subr.mxu0 0.0
    %1242 = vmatpush1.msra.mxu0 0.0
    %1243 = vmatprep.subr.mxu0 0.0
    %1244 = vmatpush1.msra.mxu0 0.0
    %1245 = vmatprep.subr.mxu0 0.0
    %1246 = vmatpush1.msra.mxu0 0.0
    %1247 = vmatprep.subr.mxu0 0.0
    %1248 = vmatpush1.msra.mxu0 0.0
    %1249 = vmatprep.subr.mxu0 0.0
    %1250 = vmatpush1.msra.mxu0 0.0
    %1251 = vmatprep.subr.mxu0 0.0
    %1252 = vmatpush1.msra.mxu0 0.0
    %1253 = vmatprep.subr.mxu0 0.0
    %1254 = vmatpush1.msra.mxu0 0.0
    %1255 = vmatprep.subr.mxu0 0.0
    %v1256 = vand.u32 %v994, 4294901760
    %1257 = vmatpush1.msra.mxu0 %v1256
    %1258 = vmatprep.subr.mxu0 0.0
    %1259 = vmatpush2.msra.mxu0 0.0
    %1260 = vmatprep.subr.mxu0 0.0
    %1261 = vmatpush2.msra.mxu0 0.0
    %1262 = vmatprep.subr.mxu0 0.0
    %1263 = vmatpush2.msra.mxu0 0.0
    %1264 = vmatprep.subr.mxu0 0.0
    %1265 = vmatpush2.msra.mxu0 0.0
    %1266 = vmatprep.subr.mxu0 0.0
    %1267 = vmatpush2.msra.mxu0 0.0
    %1268 = vmatprep.subr.mxu0 0.0
    %1269 = vmatpush2.msra.mxu0 0.0
    %1270 = vmatprep.subr.mxu0 0.0
    %1271 = vmatpush2.msra.mxu0 0.0
    %1272 = vmatprep.subr.mxu0 0.0
    %1273 = vmatpush2.msra.mxu0 0.0
    %1274 = vmatprep.subr.mxu0 0.0
    %1275 = vmatpush2.msra.mxu0 0.0
    %1276 = vmatprep.subr.mxu0 0.0
    %1277 = vmatpush2.msra.mxu0 0.0
    %1278 = vmatprep.subr.mxu0 0.0
    %1279 = vmatpush2.msra.mxu0 0.0
    %1280 = vmatprep.subr.mxu0 0.0
    %1281 = vmatpush2.msra.mxu0 0.0
    %1282 = vmatprep.subr.mxu0 0.0
    %1283 = vmatpush2.msra.mxu0 0.0
    %1284 = vmatprep.subr.mxu0 0.0
    %1285 = vmatpush2.msra.mxu0 0.0
    %1286 = vmatprep.subr.mxu0 0.0
    %1287 = vmatpush2.msra.mxu0 0.0
    %1288 = vmatprep.subr.mxu0 0.0
    %1289 = vmatpush2.msra.mxu0 0.0
    %1290 = vmatprep.mubr.f32.mxu0 0.0
    %v1291 = vand.u32 %v997, 4294901760
    %v1292 = vsub.f32 %v997, %v1291
    %v1293 = vand.u32 %v1292, 4294901760
    %1294 = vmatmul.mubr.f32.gmra.mxu0 %v1293
    %v1295 = vpop.f32.mrf.mxu0
    %v1296 = vadd.f32 %v1222, %v1295
    %v1297 = vpop.f32.mrf.mxu0
    %1298 = vdwg.mxu0
    %1299 = vmatprep.subr.mxu0 0.0
    %1300 = vmatpush1.msra.mxu0 0.0
    %1301 = vmatprep.subr.mxu0 0.0
    %1302 = vmatpush1.msra.mxu0 0.0
    %1303 = vmatprep.subr.mxu0 0.0
    %1304 = vmatpush1.msra.mxu0 0.0
    %1305 = vmatprep.subr.mxu0 0.0
    %1306 = vmatpush1.msra.mxu0 0.0
    %1307 = vmatprep.subr.mxu0 0.0
    %1308 = vmatpush1.msra.mxu0 0.0
    %1309 = vmatprep.subr.mxu0 0.0
    %1310 = vmatpush1.msra.mxu0 0.0
    %1311 = vmatprep.subr.mxu0 0.0
    %1312 = vmatpush1.msra.mxu0 0.0
    %1313 = vmatprep.subr.mxu0 0.0
    %1314 = vmatpush1.msra.mxu0 0.0
    %1315 = vmatprep.subr.mxu0 0.0
    %1316 = vmatpush1.msra.mxu0 0.0
    %1317 = vmatprep.subr.mxu0 0.0
    %1318 = vmatpush1.msra.mxu0 0.0
    %1319 = vmatprep.subr.mxu0 0.0
    %1320 = vmatpush1.msra.mxu0 0.0
    %1321 = vmatprep.subr.mxu0 0.0
    %1322 = vmatpush1.msra.mxu0 0.0
    %1323 = vmatprep.subr.mxu0 0.0
    %1324 = vmatpush1.msra.mxu0 0.0
    %1325 = vmatprep.subr.mxu0 0.0
    %1326 = vmatpush1.msra.mxu0 0.0
    %1327 = vmatprep.subr.mxu0 0.0
    %1328 = vmatpush1.msra.mxu0 0.0
    %1329 = vmatprep.subr.mxu0 0.0
    %v1330 = vand.u32 %v994, 4294901760
    %v1331 = vsub.f32 %v994, %v1330
    %v1332 = vand.u32 %v1331, 4294901760
    %1333 = vmatpush1.msra.mxu0 %v1332
    %1334 = vmatprep.subr.mxu0 0.0
    %1335 = vmatpush2.msra.mxu0 0.0
    %1336 = vmatprep.subr.mxu0 0.0
    %1337 = vmatpush2.msra.mxu0 0.0
    %1338 = vmatprep.subr.mxu0 0.0
    %1339 = vmatpush2.msra.mxu0 0.0
    %1340 = vmatprep.subr.mxu0 0.0
    %1341 = vmatpush2.msra.mxu0 0.0
    %1342 = vmatprep.subr.mxu0 0.0
    %1343 = vmatpush2.msra.mxu0 0.0
    %1344 = vmatprep.subr.mxu0 0.0
    %1345 = vmatpush2.msra.mxu0 0.0
    %1346 = vmatprep.subr.mxu0 0.0
    %1347 = vmatpush2.msra.mxu0 0.0
    %1348 = vmatprep.subr.mxu0 0.0
    %1349 = vmatpush2.msra.mxu0 0.0
    %1350 = vmatprep.subr.mxu0 0.0
    %1351 = vmatpush2.msra.mxu0 0.0
    %1352 = vmatprep.subr.mxu0 0.0
    %1353 = vmatpush2.msra.mxu0 0.0
    %1354 = vmatprep.subr.mxu0 0.0
    %1355 = vmatpush2.msra.mxu0 0.0
    %1356 = vmatprep.subr.mxu0 0.0
    %1357 = vmatpush2.msra.mxu0 0.0
    %1358 = vmatprep.subr.mxu0 0.0
    %1359 = vmatpush2.msra.mxu0 0.0
    %1360 = vmatprep.subr.mxu0 0.0
    %1361 = vmatpush2.msra.mxu0 0.0
    %1362 = vmatprep.subr.mxu0 0.0
    %1363 = vmatpush2.msra.mxu0 0.0
    %1364 = vmatprep.subr.mxu0 0.0
    %1365 = vmatpush2.msra.mxu0 0.0
    %1366 = vmatprep.mubr.f32.mxu0 0.0
    %v1367 = vand.u32 %v997, 4294901760
    %1368 = vmatmul.mubr.f32.gmra.mxu0 %v1367
    %v1369 = vpop.f32.mrf.mxu0
    %v1370 = vadd.f32 %v1296, %v1369
    %v1371 = vpop.f32.mrf.mxu0
    %1372 = vdwg.mxu0
    %1373 = vmatprep.subr.mxu0 0.0
    %1374 = vmatpush1.msra.mxu0 0.0
    %1375 = vmatprep.subr.mxu0 0.0
    %1376 = vmatpush1.msra.mxu0 0.0
    %1377 = vmatprep.subr.mxu0 0.0
    %1378 = vmatpush1.msra.mxu0 0.0
    %1379 = vmatprep.subr.mxu0 0.0
    %1380 = vmatpush1.msra.mxu0 0.0
    %1381 = vmatprep.subr.mxu0 0.0
    %1382 = vmatpush1.msra.mxu0 0.0
    %1383 = vmatprep.subr.mxu0 0.0
    %1384 = vmatpush1.msra.mxu0 0.0
    %1385 = vmatprep.subr.mxu0 0.0
    %1386 = vmatpush1.msra.mxu0 0.0
    %1387 = vmatprep.subr.mxu0 0.0
    %1388 = vmatpush1.msra.mxu0 0.0
    %1389 = vmatprep.subr.mxu0 0.0
    %1390 = vmatpush1.msra.mxu0 0.0
    %1391 = vmatprep.subr.mxu0 0.0
    %1392 = vmatpush1.msra.mxu0 0.0
    %1393 = vmatprep.subr.mxu0 0.0
    %1394 = vmatpush1.msra.mxu0 0.0
    %1395 = vmatprep.subr.mxu0 0.0
    %1396 = vmatpush1.msra.mxu0 0.0
    %1397 = vmatprep.subr.mxu0 0.0
    %1398 = vmatpush1.msra.mxu0 0.0
    %1399 = vmatprep.subr.mxu0 0.0
    %1400 = vmatpush1.msra.mxu0 0.0
    %1401 = vmatprep.subr.mxu0 0.0
    %1402 = vmatpush1.msra.mxu0 0.0
    %1403 = vmatprep.subr.mxu0 0.0
    %v1404 = vand.u32 %v994, 4294901760
    %1405 = vmatpush1.msra.mxu0 %v1404
    %1406 = vmatprep.subr.mxu0 0.0
    %1407 = vmatpush2.msra.mxu0 0.0
    %1408 = vmatprep.subr.mxu0 0.0
    %1409 = vmatpush2.msra.mxu0 0.0
    %1410 = vmatprep.subr.mxu0 0.0
    %1411 = vmatpush2.msra.mxu0 0.0
    %1412 = vmatprep.subr.mxu0 0.0
    %1413 = vmatpush2.msra.mxu0 0.0
    %1414 = vmatprep.subr.mxu0 0.0
    %1415 = vmatpush2.msra.mxu0 0.0
    %1416 = vmatprep.subr.mxu0 0.0
    %1417 = vmatpush2.msra.mxu0 0.0
    %1418 = vmatprep.subr.mxu0 0.0
    %1419 = vmatpush2.msra.mxu0 0.0
    %1420 = vmatprep.subr.mxu0 0.0
    %1421 = vmatpush2.msra.mxu0 0.0
    %1422 = vmatprep.subr.mxu0 0.0
    %1423 = vmatpush2.msra.mxu0 0.0
    %1424 = vmatprep.subr.mxu0 0.0
    %1425 = vmatpush2.msra.mxu0 0.0
    %1426 = vmatprep.subr.mxu0 0.0
    %1427 = vmatpush2.msra.mxu0 0.0
    %1428 = vmatprep.subr.mxu0 0.0
    %1429 = vmatpush2.msra.mxu0 0.0
    %1430 = vmatprep.subr.mxu0 0.0
    %1431 = vmatpush2.msra.mxu0 0.0
    %1432 = vmatprep.subr.mxu0 0.0
    %1433 = vmatpush2.msra.mxu0 0.0
    %1434 = vmatprep.subr.mxu0 0.0
    %1435 = vmatpush2.msra.mxu0 0.0
    %1436 = vmatprep.subr.mxu0 0.0
    %1437 = vmatpush2.msra.mxu0 0.0
    %1438 = vmatprep.mubr.f32.mxu0 0.0
    %v1439 = vand.u32 %v997, 4294901760
    %1440 = vmatmul.mubr.f32.gmra.mxu0 %v1439
    %v1441 = vpop.f32.mrf.mxu0
    %v1442 = vadd.f32 %v1370, %v1441
    %v1443 = vpop.f32.mrf.mxu0
    %1444 = vdwg.mxu0
    %v1445 = vmax.f32 %v1442, 0.0
    %v1447 = vsel %vm519, %v1445, 0
    %1449 = vmatprep.subr.mxu0 0.0
    %1450 = vmatpush1.msra.mxu0 0.0
    %1451 = vmatprep.subr.mxu0 0.0
    %1452 = vmatpush1.msra.mxu0 0.0
    %1453 = vmatprep.subr.mxu0 0.0
    %1454 = vmatpush1.msra.mxu0 0.0
    %1455 = vmatprep.subr.mxu0 0.0
    %1456 = vmatpush1.msra.mxu0 0.0
    %1457 = vmatprep.subr.mxu0 0.0
    %1458 = vmatpush1.msra.mxu0 0.0
    %1459 = vmatprep.subr.mxu0 0.0
    %1460 = vmatpush1.msra.mxu0 0.0
    %1461 = vmatprep.subr.mxu0 0.0
    %1462 = vmatpush1.msra.mxu0 0.0
    %1463 = vmatprep.subr.mxu0 0.0
    %1464 = vmatpush1.msra.mxu0 0.0
    %1465 = vmatprep.subr.mxu0 0.0
    %1466 = vmatpush1.msra.mxu0 0.0
    %1467 = vmatprep.subr.mxu0 0.0
    %1468 = vmatpush1.msra.mxu0 0.0
    %1469 = vmatprep.subr.mxu0 0.0
    %1470 = vmatpush1.msra.mxu0 0.0
    %1471 = vmatprep.subr.mxu0 0.0
    %1472 = vmatpush1.msra.mxu0 0.0
    %1473 = vmatprep.subr.mxu0 0.0
    %1474 = vmatpush1.msra.mxu0 0.0
    %1475 = vmatprep.subr.mxu0 0.0
    %1476 = vmatpush1.msra.mxu0 0.0
    %1477 = vmatprep.subr.mxu0 0.0
    %1478 = vmatpush1.msra.mxu0 0.0
    %1479 = vmatprep.subr.mxu0 0.0
    %v1480 = vand.u32 %v1447, 4294901760
    %1481 = vmatpush1.msra.mxu0 %v1480
    %1482 = vmatprep.subr.mxu0 0.0
    %1483 = vmatpush2.msra.mxu0 0.0
    %1484 = vmatprep.subr.mxu0 0.0
    %1485 = vmatpush2.msra.mxu0 0.0
    %1486 = vmatprep.subr.mxu0 0.0
    %1487 = vmatpush2.msra.mxu0 0.0
    %1488 = vmatprep.subr.mxu0 0.0
    %1489 = vmatpush2.msra.mxu0 0.0
    %1490 = vmatprep.subr.mxu0 0.0
    %1491 = vmatpush2.msra.mxu0 0.0
    %1492 = vmatprep.subr.mxu0 0.0
    %1493 = vmatpush2.msra.mxu0 0.0
    %1494 = vmatprep.subr.mxu0 0.0
    %1495 = vmatpush2.msra.mxu0 0.0
    %1496 = vmatprep.subr.mxu0 0.0
    %1497 = vmatpush2.msra.mxu0 0.0
    %1498 = vmatprep.subr.mxu0 0.0
    %1499 = vmatpush2.msra.mxu0 0.0
    %1500 = vmatprep.subr.mxu0 0.0
    %1501 = vmatpush2.msra.mxu0 0.0
    %1502 = vmatprep.subr.mxu0 0.0
    %1503 = vmatpush2.msra.mxu0 0.0
    %1504 = vmatprep.subr.mxu0 0.0
    %1505 = vmatpush2.msra.mxu0 0.0
    %1506 = vmatprep.subr.mxu0 0.0
    %1507 = vmatpush2.msra.mxu0 0.0
    %1508 = vmatprep.subr.mxu0 0.0
    %1509 = vmatpush2.msra.mxu0 0.0
    %1510 = vmatprep.subr.mxu0 0.0
    %1511 = vmatpush2.msra.mxu0 0.0
    %1512 = vmatprep.subr.mxu0 0.0
    %1513 = vmatpush2.msra.mxu0 0.0
    %1514 = vmatprep.mubr.f32.mxu0 0.0
    %v1515 = vand.u32 %v517, 4294901760
    %v1516 = vsub.f32 %v517, %v1515
    %v1517 = vand.u32 %v1516, 4294901760
    %v1518 = vsub.f32 %v1516, %v1517
    %v1519 = vand.u32 %v1518, 4294901760
    %1520 = vmatmul.mubr.f32.gmra.mxu0 %v1519
    %v1521 = vpop.f32.mrf.mxu0
    %v1522 = vadd.f32 0.0, %v1521
    %v1523 = vpop.f32.mrf.mxu0
    %1524 = vdwg.mxu0
    %1525 = vmatprep.subr.mxu0 0.0
    %1526 = vmatpush1.msra.mxu0 0.0
    %1527 = vmatprep.subr.mxu0 0.0
    %1528 = vmatpush1.msra.mxu0 0.0
    %1529 = vmatprep.subr.mxu0 0.0
    %1530 = vmatpush1.msra.mxu0 0.0
    %1531 = vmatprep.subr.mxu0 0.0
    %1532 = vmatpush1.msra.mxu0 0.0
    %1533 = vmatprep.subr.mxu0 0.0
    %1534 = vmatpush1.msra.mxu0 0.0
    %1535 = vmatprep.subr.mxu0 0.0
    %1536 = vmatpush1.msra.mxu0 0.0
    %1537 = vmatprep.subr.mxu0 0.0
    %1538 = vmatpush1.msra.mxu0 0.0
    %1539 = vmatprep.subr.mxu0 0.0
    %1540 = vmatpush1.msra.mxu0 0.0
    %1541 = vmatprep.subr.mxu0 0.0
    %1542 = vmatpush1.msra.mxu0 0.0
    %1543 = vmatprep.subr.mxu0 0.0
    %1544 = vmatpush1.msra.mxu0 0.0
    %1545 = vmatprep.subr.mxu0 0.0
    %1546 = vmatpush1.msra.mxu0 0.0
    %1547 = vmatprep.subr.mxu0 0.0
    %1548 = vmatpush1.msra.mxu0 0.0
    %1549 = vmatprep.subr.mxu0 0.0
    %1550 = vmatpush1.msra.mxu0 0.0
    %1551 = vmatprep.subr.mxu0 0.0
    %1552 = vmatpush1.msra.mxu0 0.0
    %1553 = vmatprep.subr.mxu0 0.0
    %1554 = vmatpush1.msra.mxu0 0.0
    %1555 = vmatprep.subr.mxu0 0.0
    %v1556 = vand.u32 %v1447, 4294901760
    %v1557 = vsub.f32 %v1447, %v1556
    %v1558 = vand.u32 %v1557, 4294901760
    %v1559 = vsub.f32 %v1557, %v1558
    %v1560 = vand.u32 %v1559, 4294901760
    %1561 = vmatpush1.msra.mxu0 %v1560
    %1562 = vmatprep.subr.mxu0 0.0
    %1563 = vmatpush2.msra.mxu0 0.0
    %1564 = vmatprep.subr.mxu0 0.0
    %1565 = vmatpush2.msra.mxu0 0.0
    %1566 = vmatprep.subr.mxu0 0.0
    %1567 = vmatpush2.msra.mxu0 0.0
    %1568 = vmatprep.subr.mxu0 0.0
    %1569 = vmatpush2.msra.mxu0 0.0
    %1570 = vmatprep.subr.mxu0 0.0
    %1571 = vmatpush2.msra.mxu0 0.0
    %1572 = vmatprep.subr.mxu0 0.0
    %1573 = vmatpush2.msra.mxu0 0.0
    %1574 = vmatprep.subr.mxu0 0.0
    %1575 = vmatpush2.msra.mxu0 0.0
    %1576 = vmatprep.subr.mxu0 0.0
    %1577 = vmatpush2.msra.mxu0 0.0
    %1578 = vmatprep.subr.mxu0 0.0
    %1579 = vmatpush2.msra.mxu0 0.0
    %1580 = vmatprep.subr.mxu0 0.0
    %1581 = vmatpush2.msra.mxu0 0.0
    %1582 = vmatprep.subr.mxu0 0.0
    %1583 = vmatpush2.msra.mxu0 0.0
    %1584 = vmatprep.subr.mxu0 0.0
    %1585 = vmatpush2.msra.mxu0 0.0
    %1586 = vmatprep.subr.mxu0 0.0
    %1587 = vmatpush2.msra.mxu0 0.0
    %1588 = vmatprep.subr.mxu0 0.0
    %1589 = vmatpush2.msra.mxu0 0.0
    %1590 = vmatprep.subr.mxu0 0.0
    %1591 = vmatpush2.msra.mxu0 0.0
    %1592 = vmatprep.subr.mxu0 0.0
    %1593 = vmatpush2.msra.mxu0 0.0
    %1594 = vmatprep.mubr.f32.mxu0 0.0
    %v1595 = vand.u32 %v517, 4294901760
    %1596 = vmatmul.mubr.f32.gmra.mxu0 %v1595
    %v1597 = vpop.f32.mrf.mxu0
    %v1598 = vadd.f32 %v1522, %v1597
    %v1599 = vpop.f32.mrf.mxu0
    %1600 = vdwg.mxu0
    %1601 = vmatprep.subr.mxu0 0.0
    %1602 = vmatpush1.msra.mxu0 0.0
    %1603 = vmatprep.subr.mxu0 0.0
    %1604 = vmatpush1.msra.mxu0 0.0
    %1605 = vmatprep.subr.mxu0 0.0
    %1606 = vmatpush1.msra.mxu0 0.0
    %1607 = vmatprep.subr.mxu0 0.0
    %1608 = vmatpush1.msra.mxu0 0.0
    %1609 = vmatprep.subr.mxu0 0.0
    %1610 = vmatpush1.msra.mxu0 0.0
    %1611 = vmatprep.subr.mxu0 0.0
    %1612 = vmatpush1.msra.mxu0 0.0
    %1613 = vmatprep.subr.mxu0 0.0
    %1614 = vmatpush1.msra.mxu0 0.0
    %1615 = vmatprep.subr.mxu0 0.0
    %1616 = vmatpush1.msra.mxu0 0.0
    %1617 = vmatprep.subr.mxu0 0.0
    %1618 = vmatpush1.msra.mxu0 0.0
    %1619 = vmatprep.subr.mxu0 0.0
    %1620 = vmatpush1.msra.mxu0 0.0
    %1621 = vmatprep.subr.mxu0 0.0
    %1622 = vmatpush1.msra.mxu0 0.0
    %1623 = vmatprep.subr.mxu0 0.0
    %1624 = vmatpush1.msra.mxu0 0.0
    %1625 = vmatprep.subr.mxu0 0.0
    %1626 = vmatpush1.msra.mxu0 0.0
    %1627 = vmatprep.subr.mxu0 0.0
    %1628 = vmatpush1.msra.mxu0 0.0
    %1629 = vmatprep.subr.mxu0 0.0
    %1630 = vmatpush1.msra.mxu0 0.0
    %1631 = vmatprep.subr.mxu0 0.0
    %v1632 = vand.u32 %v1447, 4294901760
    %v1633 = vsub.f32 %v1447, %v1632
    %1634 = vmatpush1.msra.mxu0 %v1633
    %1635 = vmatprep.subr.mxu0 0.0
    %1636 = vmatpush2.msra.mxu0 0.0
    %1637 = vmatprep.subr.mxu0 0.0
    %1638 = vmatpush2.msra.mxu0 0.0
    %1639 = vmatprep.subr.mxu0 0.0
    %1640 = vmatpush2.msra.mxu0 0.0
    %1641 = vmatprep.subr.mxu0 0.0
    %1642 = vmatpush2.msra.mxu0 0.0
    %1643 = vmatprep.subr.mxu0 0.0
    %1644 = vmatpush2.msra.mxu0 0.0
    %1645 = vmatprep.subr.mxu0 0.0
    %1646 = vmatpush2.msra.mxu0 0.0
    %1647 = vmatprep.subr.mxu0 0.0
    %1648 = vmatpush2.msra.mxu0 0.0
    %1649 = vmatprep.subr.mxu0 0.0
    %1650 = vmatpush2.msra.mxu0 0.0
    %1651 = vmatprep.subr.mxu0 0.0
    %1652 = vmatpush2.msra.mxu0 0.0
    %1653 = vmatprep.subr.mxu0 0.0
    %1654 = vmatpush2.msra.mxu0 0.0
    %1655 = vmatprep.subr.mxu0 0.0
    %1656 = vmatpush2.msra.mxu0 0.0
    %1657 = vmatprep.subr.mxu0 0.0
    %1658 = vmatpush2.msra.mxu0 0.0
    %1659 = vmatprep.subr.mxu0 0.0
    %1660 = vmatpush2.msra.mxu0 0.0
    %1661 = vmatprep.subr.mxu0 0.0
    %1662 = vmatpush2.msra.mxu0 0.0
    %1663 = vmatprep.subr.mxu0 0.0
    %1664 = vmatpush2.msra.mxu0 0.0
    %1665 = vmatprep.subr.mxu0 0.0
    %1666 = vmatpush2.msra.mxu0 0.0
    %1667 = vmatprep.mubr.f32.mxu0 0.0
    %v1668 = vand.u32 %v517, 4294901760
    %v1669 = vsub.f32 %v517, %v1668
    %1670 = vmatmul.mubr.f32.gmra.mxu0 %v1669
    %v1671 = vpop.f32.mrf.mxu0
    %v1672 = vadd.f32 %v1598, %v1671
    %v1673 = vpop.f32.mrf.mxu0
    %1674 = vdwg.mxu0
    %1675 = vmatprep.subr.mxu0 0.0
    %1676 = vmatpush1.msra.mxu0 0.0
    %1677 = vmatprep.subr.mxu0 0.0
    %1678 = vmatpush1.msra.mxu0 0.0
    %1679 = vmatprep.subr.mxu0 0.0
    %1680 = vmatpush1.msra.mxu0 0.0
    %1681 = vmatprep.subr.mxu0 0.0
    %1682 = vmatpush1.msra.mxu0 0.0
    %1683 = vmatprep.subr.mxu0 0.0
    %1684 = vmatpush1.msra.mxu0 0.0
    %1685 = vmatprep.subr.mxu0 0.0
    %1686 = vmatpush1.msra.mxu0 0.0
    %1687 = vmatprep.subr.mxu0 0.0
    %1688 = vmatpush1.msra.mxu0 0.0
    %1689 = vmatprep.subr.mxu0 0.0
    %1690 = vmatpush1.msra.mxu0 0.0
    %1691 = vmatprep.subr.mxu0 0.0
    %1692 = vmatpush1.msra.mxu0 0.0
    %1693 = vmatprep.subr.mxu0 0.0
    %1694 = vmatpush1.msra.mxu0 0.0
    %1695 = vmatprep.subr.mxu0 0.0
    %1696 = vmatpush1.msra.mxu0 0.0
    %1697 = vmatprep.subr.mxu0 0.0
    %1698 = vmatpush1.msra.mxu0 0.0
    %1699 = vmatprep.subr.mxu0 0.0
    %1700 = vmatpush1.msra.mxu0 0.0
    %1701 = vmatprep.subr.mxu0 0.0
    %1702 = vmatpush1.msra.mxu0 0.0
    %1703 = vmatprep.subr.mxu0 0.0
    %1704 = vmatpush1.msra.mxu0 0.0
    %1705 = vmatprep.subr.mxu0 0.0
    %v1706 = vand.u32 %v1447, 4294901760
    %1707 = vmatpush1.msra.mxu0 %v1706
    %1708 = vmatprep.subr.mxu0 0.0
    %1709 = vmatpush2.msra.mxu0 0.0
    %1710 = vmatprep.subr.mxu0 0.0
    %1711 = vmatpush2.msra.mxu0 0.0
    %1712 = vmatprep.subr.mxu0 0.0
    %1713 = vmatpush2.msra.mxu0 0.0
    %1714 = vmatprep.subr.mxu0 0.0
    %1715 = vmatpush2.msra.mxu0 0.0
    %1716 = vmatprep.subr.mxu0 0.0
    %1717 = vmatpush2.msra.mxu0 0.0
    %1718 = vmatprep.subr.mxu0 0.0
    %1719 = vmatpush2.msra.mxu0 0.0
    %1720 = vmatprep.subr.mxu0 0.0
    %1721 = vmatpush2.msra.mxu0 0.0
    %1722 = vmatprep.subr.mxu0 0.0
    %1723 = vmatpush2.msra.mxu0 0.0
    %1724 = vmatprep.subr.mxu0 0.0
    %1725 = vmatpush2.msra.mxu0 0.0
    %1726 = vmatprep.subr.mxu0 0.0
    %1727 = vmatpush2.msra.mxu0 0.0
    %1728 = vmatprep.subr.mxu0 0.0
    %1729 = vmatpush2.msra.mxu0 0.0
    %1730 = vmatprep.subr.mxu0 0.0
    %1731 = vmatpush2.msra.mxu0 0.0
    %1732 = vmatprep.subr.mxu0 0.0
    %1733 = vmatpush2.msra.mxu0 0.0
    %1734 = vmatprep.subr.mxu0 0.0
    %1735 = vmatpush2.msra.mxu0 0.0
    %1736 = vmatprep.subr.mxu0 0.0
    %1737 = vmatpush2.msra.mxu0 0.0
    %1738 = vmatprep.subr.mxu0 0.0
    %1739 = vmatpush2.msra.mxu0 0.0
    %1740 = vmatprep.mubr.f32.mxu0 0.0
    %v1741 = vand.u32 %v517, 4294901760
    %v1742 = vsub.f32 %v517, %v1741
    %v1743 = vand.u32 %v1742, 4294901760
    %1744 = vmatmul.mubr.f32.gmra.mxu0 %v1743
    %v1745 = vpop.f32.mrf.mxu0
    %v1746 = vadd.f32 %v1672, %v1745
    %v1747 = vpop.f32.mrf.mxu0
    %1748 = vdwg.mxu0
    %1749 = vmatprep.subr.mxu0 0.0
    %1750 = vmatpush1.msra.mxu0 0.0
    %1751 = vmatprep.subr.mxu0 0.0
    %1752 = vmatpush1.msra.mxu0 0.0
    %1753 = vmatprep.subr.mxu0 0.0
    %1754 = vmatpush1.msra.mxu0 0.0
    %1755 = vmatprep.subr.mxu0 0.0
    %1756 = vmatpush1.msra.mxu0 0.0
    %1757 = vmatprep.subr.mxu0 0.0
    %1758 = vmatpush1.msra.mxu0 0.0
    %1759 = vmatprep.subr.mxu0 0.0
    %1760 = vmatpush1.msra.mxu0 0.0
    %1761 = vmatprep.subr.mxu0 0.0
    %1762 = vmatpush1.msra.mxu0 0.0
    %1763 = vmatprep.subr.mxu0 0.0
    %1764 = vmatpush1.msra.mxu0 0.0
    %1765 = vmatprep.subr.mxu0 0.0
    %1766 = vmatpush1.msra.mxu0 0.0
    %1767 = vmatprep.subr.mxu0 0.0
    %1768 = vmatpush1.msra.mxu0 0.0
    %1769 = vmatprep.subr.mxu0 0.0
    %1770 = vmatpush1.msra.mxu0 0.0
    %1771 = vmatprep.subr.mxu0 0.0
    %1772 = vmatpush1.msra.mxu0 0.0
    %1773 = vmatprep.subr.mxu0 0.0
    %1774 = vmatpush1.msra.mxu0 0.0
    %1775 = vmatprep.subr.mxu0 0.0
    %1776 = vmatpush1.msra.mxu0 0.0
    %1777 = vmatprep.subr.mxu0 0.0
    %1778 = vmatpush1.msra.mxu0 0.0
    %1779 = vmatprep.subr.mxu0 0.0
    %v1780 = vand.u32 %v1447, 4294901760
    %v1781 = vsub.f32 %v1447, %v1780
    %v1782 = vand.u32 %v1781, 4294901760
    %1783 = vmatpush1.msra.mxu0 %v1782
    %1784 = vmatprep.subr.mxu0 0.0
    %1785 = vmatpush2.msra.mxu0 0.0
    %1786 = vmatprep.subr.mxu0 0.0
    %1787 = vmatpush2.msra.mxu0 0.0
    %1788 = vmatprep.subr.mxu0 0.0
    %1789 = vmatpush2.msra.mxu0 0.0
    %1790 = vmatprep.subr.mxu0 0.0
    %1791 = vmatpush2.msra.mxu0 0.0
    %1792 = vmatprep.subr.mxu0 0.0
    %1793 = vmatpush2.msra.mxu0 0.0
    %1794 = vmatprep.subr.mxu0 0.0
    %1795 = vmatpush2.msra.mxu0 0.0
    %1796 = vmatprep.subr.mxu0 0.0
    %1797 = vmatpush2.msra.mxu0 0.0
    %1798 = vmatprep.subr.mxu0 0.0
    %1799 = vmatpush2.msra.mxu0 0.0
    %1800 = vmatprep.subr.mxu0 0.0
    %1801 = vmatpush2.msra.mxu0 0.0
    %1802 = vmatprep.subr.mxu0 0.0
    %1803 = vmatpush2.msra.mxu0 0.0
    %1804 = vmatprep.subr.mxu0 0.0
    %1805 = vmatpush2.msra.mxu0 0.0
    %1806 = vmatprep.subr.mxu0 0.0
    %1807 = vmatpush2.msra.mxu0 0.0
    %1808 = vmatprep.subr.mxu0 0.0
    %1809 = vmatpush2.msra.mxu0 0.0
    %1810 = vmatprep.subr.mxu0 0.0
    %1811 = vmatpush2.msra.mxu0 0.0
    %1812 = vmatprep.subr.mxu0 0.0
    %1813 = vmatpush2.msra.mxu0 0.0
    %1814 = vmatprep.subr.mxu0 0.0
    %1815 = vmatpush2.msra.mxu0 0.0
    %1816 = vmatprep.mubr.f32.mxu0 0.0
    %v1817 = vand.u32 %v517, 4294901760
    %1818 = vmatmul.mubr.f32.gmra.mxu0 %v1817
    %v1819 = vpop.f32.mrf.mxu0
    %v1820 = vadd.f32 %v1746, %v1819
    %v1821 = vpop.f32.mrf.mxu0
    %1822 = vdwg.mxu0
    %1823 = vmatprep.subr.mxu0 0.0
    %1824 = vmatpush1.msra.mxu0 0.0
    %1825 = vmatprep.subr.mxu0 0.0
    %1826 = vmatpush1.msra.mxu0 0.0
    %1827 = vmatprep.subr.mxu0 0.0
    %1828 = vmatpush1.msra.mxu0 0.0
    %1829 = vmatprep.subr.mxu0 0.0
    %1830 = vmatpush1.msra.mxu0 0.0
    %1831 = vmatprep.subr.mxu0 0.0
    %1832 = vmatpush1.msra.mxu0 0.0
    %1833 = vmatprep.subr.mxu0 0.0
    %1834 = vmatpush1.msra.mxu0 0.0
    %1835 = vmatprep.subr.mxu0 0.0
    %1836 = vmatpush1.msra.mxu0 0.0
    %1837 = vmatprep.subr.mxu0 0.0
    %1838 = vmatpush1.msra.mxu0 0.0
    %1839 = vmatprep.subr.mxu0 0.0
    %1840 = vmatpush1.msra.mxu0 0.0
    %1841 = vmatprep.subr.mxu0 0.0
    %1842 = vmatpush1.msra.mxu0 0.0
    %1843 = vmatprep.subr.mxu0 0.0
    %1844 = vmatpush1.msra.mxu0 0.0
    %1845 = vmatprep.subr.mxu0 0.0
    %1846 = vmatpush1.msra.mxu0 0.0
    %1847 = vmatprep.subr.mxu0 0.0
    %1848 = vmatpush1.msra.mxu0 0.0
    %1849 = vmatprep.subr.mxu0 0.0
    %1850 = vmatpush1.msra.mxu0 0.0
    %1851 = vmatprep.subr.mxu0 0.0
    %1852 = vmatpush1.msra.mxu0 0.0
    %1853 = vmatprep.subr.mxu0 0.0
    %v1854 = vand.u32 %v1447, 4294901760
    %1855 = vmatpush1.msra.mxu0 %v1854
    %1856 = vmatprep.subr.mxu0 0.0
    %1857 = vmatpush2.msra.mxu0 0.0
    %1858 = vmatprep.subr.mxu0 0.0
    %1859 = vmatpush2.msra.mxu0 0.0
    %1860 = vmatprep.subr.mxu0 0.0
    %1861 = vmatpush2.msra.mxu0 0.0
    %1862 = vmatprep.subr.mxu0 0.0
    %1863 = vmatpush2.msra.mxu0 0.0
    %1864 = vmatprep.subr.mxu0 0.0
    %1865 = vmatpush2.msra.mxu0 0.0
    %1866 = vmatprep.subr.mxu0 0.0
    %1867 = vmatpush2.msra.mxu0 0.0
    %1868 = vmatprep.subr.mxu0 0.0
    %1869 = vmatpush2.msra.mxu0 0.0
    %1870 = vmatprep.subr.mxu0 0.0
    %1871 = vmatpush2.msra.mxu0 0.0
    %1872 = vmatprep.subr.mxu0 0.0
    %1873 = vmatpush2.msra.mxu0 0.0
    %1874 = vmatprep.subr.mxu0 0.0
    %1875 = vmatpush2.msra.mxu0 0.0
    %1876 = vmatprep.subr.mxu0 0.0
    %1877 = vmatpush2.msra.mxu0 0.0
    %1878 = vmatprep.subr.mxu0 0.0
    %1879 = vmatpush2.msra.mxu0 0.0
    %1880 = vmatprep.subr.mxu0 0.0
    %1881 = vmatpush2.msra.mxu0 0.0
    %1882 = vmatprep.subr.mxu0 0.0
    %1883 = vmatpush2.msra.mxu0 0.0
    %1884 = vmatprep.subr.mxu0 0.0
    %1885 = vmatpush2.msra.mxu0 0.0
    %1886 = vmatprep.subr.mxu0 0.0
    %1887 = vmatpush2.msra.mxu0 0.0
    %1888 = vmatprep.mubr.f32.mxu0 0.0
    %v1889 = vand.u32 %v517, 4294901760
    %1890 = vmatmul.mubr.f32.gmra.mxu0 %v1889
    %v1891 = vpop.f32.mrf.mxu0
    %v1892 = vadd.f32 %v1820, %v1891
    %v1893 = vpop.f32.mrf.mxu0
    %1894 = vdwg.mxu0
    %1896 = vset.pattern.permute.xlu0 0
    %1897 = vperm.xlu0 %1896, %v1892
    %v1898 = vpop.permute.xlu0 %1897
    %v1900 = vmul.f32 %v30, %v1898
    %v1901 = vmul.f32 %v31, %v1898
    %v1902 = vmul.f32 %v30, %v987
    %v1903 = vmul.f32 %v31, %v989
    %v1904 = vmax.f32 %v1900, %v1902
    %v1905 = vmax.f32 %v1901, %v1903
    %1906 = vst [vmem:[#allocation5] sm:$0xff] %v1904
    %1907 = vst [vmem:[#allocation5 + $0x8] sm:$0xff] %v1905
    // Predicated region
    $region22: #{tpu_custom_call.1} parent=1 // pred_check
      _
    $region23: #{tpu_custom_call.1} parent=1 // pred_check_branch
      %1909 = sbr.rel (0) target = $region25
    $region24: #{tpu_custom_call.1} parent=1 // pred_region
      %s1911 = ssub.s32 256, 256
      %1912 = vsyncadd [#allocation4], %s1911
      %s1914 = sshll.u32 [#allocation5], 4
      %s1915 = int_to_ptr.vmem [resolvable:$true] %s1914
      %1917 = dma.vmem_to_hbm [thread:$0]  %s1915, 256, %s4, [#allocation4]
    $region25: #{tpu_custom_call.1} parent=1 // pred_fallthru
      _
    // Predicated region
    $region26: #{tpu_custom_call.1} parent=1 // pred_check
      _
    $region27: #{tpu_custom_call.1} parent=1 // pred_check_branch
      %1919 = sbr.rel (0) target = $region29
    $region28: #{tpu_custom_call.1} parent=1 // pred_region
      %1920 = dma.done [#allocation4], 256
    $region29: #{tpu_custom_call.1} parent=1 // pred_fallthru
      _
    %1921 = vsyncpa [#allocation3], 1
    %1922 = vsyncpa [#allocation4], 1

</llo_original>
